<compile_context>
chip_gen: v7x
topology: tpu7x:2x2x1
jax: 0.10.0
libtpu: 0.0.40
codegen_flags: <defaults>
</compile_context>

<pallas_src>
import numpy as np
import jax
import jax.numpy as jnp
from jax import lax
from jax.experimental import pallas as pl
from jax.experimental.pallas import tpu as pltpu


def _loss_pre_kernel(shape_ref, skp_ref, sko_ref, out_ref,
                     d1_ref, p1_ref, d2_ref, p2_ref, acc_ref):
    # Blocks:
    #   shape_ref : (1, Nt, 6)  tile of surface points, [:, 0:3]=xyz, [:, 3:6]=normal
    #   skp_ref   : (1, 3, M)   skeleton coordinates, channels-first (resident per batch)
    #   sko_ref   : (1, 3, M)   skeleton normals, channels-first
    #   out_ref   : (1, 1, 128) per-batch partials: lane0=cd1, lane1=cd2, lane2=normal_sum
    # Scratch (persists across the N-tile axis; re-initialised at nt == 0):
    #   d1_ref, p1_ref : (1, M)  best d^2 per skeleton point and |dot| payload at it
    #   d2_ref, p2_ref : (1, M)  second-best d^2 and its |dot| payload
    #   acc_ref        : (1, 1)  running sum over shape points of sqrt(min_m d^2)
    nt = pl.program_id(1)
    n_tiles = pl.num_programs(1)

    @pl.when(nt == 0)
    def _init():
        d1_ref[...] = jnp.full(d1_ref.shape, jnp.inf, jnp.float32)
        d2_ref[...] = jnp.full(d2_ref.shape, jnp.inf, jnp.float32)
        p1_ref[...] = jnp.zeros(p1_ref.shape, jnp.float32)
        p2_ref[...] = jnp.zeros(p2_ref.shape, jnp.float32)
        acc_ref[...] = jnp.zeros(acc_ref.shape, jnp.float32)

    blk = shape_ref[0]                       # (Nt, 6)
    skp = skp_ref[0]                         # (3, M)
    sko = sko_ref[0]                         # (3, M)
    shp = blk[:, 0:3]                        # (Nt, 3) surface xyz
    shn = blk[:, 3:6]                        # (Nt, 3) surface normals
    n_tile = shp.shape[0]
    m_pts = skp.shape[1]

    # Pairwise squared distances on the MXU:  d2[n,m] = ||p_n||^2 + ||s_m||^2 - 2 <p_n, s_m>
    cross = jnp.dot(shp, skp, preferred_element_type=jnp.float32)          # (Nt, M)
    p_sq = jnp.sum(shp * shp, axis=1, keepdims=True)                       # (Nt, 1)
    s_sq = jnp.sum(skp * skp, axis=0, keepdims=True)                       # (1, M)
    dsq = jnp.maximum(p_sq + s_sq - 2.0 * cross, 0.0)                      # clamp round-off

    # |<shape_normal[n], skel_nori[m]>| on the MXU as well.
    absd = jnp.abs(jnp.dot(shn, sko, preferred_element_type=jnp.float32))  # (Nt, M)

    # Chamfer shape->skeleton: sqrt AFTER the min; accumulate a per-batch scalar.
    acc_ref[...] += jnp.sum(jnp.sqrt(jnp.min(dsq, axis=1, keepdims=True)))

    # Exact top-2 nearest shape points per skeleton point within this tile
    # (lowest-global-index tie-break; exactly two distinct neighbours selected,
    #  mins are over the same dsq used in the equality tests).
    gidx = lax.broadcasted_iota(jnp.int32, (n_tile, m_pts), 0) + nt * n_tile
    big = 2 ** 31 - 1
    m1 = jnp.min(dsq, axis=0, keepdims=True)                               # (1, M)
    i1 = jnp.min(jnp.where(dsq == m1, gidx, big), axis=0, keepdims=True)
    sel1 = gidx == i1
    q1 = jnp.sum(jnp.where(sel1, absd, 0.0), axis=0, keepdims=True)        # |dot| at NN1
    dsq_m = jnp.where(sel1, jnp.inf, dsq)
    m2 = jnp.min(dsq_m, axis=0, keepdims=True)
    i2 = jnp.min(jnp.where(dsq_m == m2, gidx, big), axis=0, keepdims=True)
    q2 = jnp.sum(jnp.where(gidx == i2, absd, 0.0), axis=0, keepdims=True)  # |dot| at NN2

    # Merge this tile's (m1,q1),(m2,q2) into the running top-2.  Strict '<' keeps the
    # earlier (lower global index) point on exact cross-tile ties, matching the reference.
    b1, pb1 = d1_ref[...], p1_ref[...]
    b2, pb2 = d2_ref[...], p2_ref[...]
    take1 = m1 < b1
    nb1 = jnp.where(take1, m1, b1)
    np1 = jnp.where(take1, q1, pb1)
    disp_d = jnp.where(take1, b1, m1)          # value displaced from (or rejected by) slot 1
    disp_p = jnp.where(take1, pb1, q1)
    take2 = disp_d < b2
    nb2 = jnp.where(take2, disp_d, b2)
    np2 = jnp.where(take2, disp_p, pb2)
    take3 = m2 < nb2                            # m2 >= m1 >= nb1, so it only targets slot 2
    nb2 = jnp.where(take3, m2, nb2)
    np2 = jnp.where(take3, q2, np2)
    d1_ref[...] = nb1
    p1_ref[...] = np1
    d2_ref[...] = nb2
    p2_ref[...] = np2

    # Finalize: reduce to 3 per-batch scalars packed into one lane-dense 128-wide row.
    @pl.when(nt == n_tiles - 1)
    def _finalize():
        cd1 = acc_ref[...]                                   # (1,1)  sum_n min_m ||.||
        cd2 = jnp.sum(jnp.sqrt(d1_ref[...]))                 # sum_m min_n ||.||
        lnorm = 0.5 * jnp.sum(p1_ref[...] + p2_ref[...])     # sum_m mean_{k=1,2} |dot|
        lane = lax.broadcasted_iota(jnp.int32, (1, 128), 1)
        out_ref[0] = (jnp.where(lane == 0, cd1, 0.0)
                      + jnp.where(lane == 1, cd2, 0.0)
                      + jnp.where(lane == 2, lnorm, 0.0))


def _pick_block_n(n, max_block=512):
    """Largest N tile that divides n, is a multiple of 8 (layout) and <= max_block."""
    if n <= max_block:
        return n
    start = max_block - (max_block % 8)
    for t in range(start, 7, -8):
        if n % t == 0:
            return t
    return n   # fall back to a single tile


def get_loss_pre(shape_xyz, skel_xyz, skel_nori, *, block_n=None):
    """shape_xyz: (B, N, 6) [xyz | normal], skel_xyz: (B, M, 3), skel_nori: (B, M, 3)."""
    B, N, C = shape_xyz.shape
    M = skel_xyz.shape[1]
    if block_n is None:
        block_n = _pick_block_n(N)
    assert N % block_n == 0, (N, block_n)
    n_tiles = N // block_n

    # No transpose of the large shape array; only the tiny skeleton arrays go channels-first.
    shape_f = shape_xyz.astype(jnp.float32)                              # (B, N, 6)
    skp_t = jnp.transpose(skel_xyz.astype(jnp.float32), (0, 2, 1))       # (B, 3, M)
    sko_t = jnp.transpose(skel_nori.astype(jnp.float32), (0, 2, 1))      # (B, 3, M)

    partials = pl.pallas_call(
        _loss_pre_kernel,
        grid=(B, n_tiles),
        in_specs=[
            pl.BlockSpec((1, block_n, C), lambda b, t: (b, t, 0)),
            pl.BlockSpec((1, 3, M), lambda b, t: (b, 0, 0)),
            pl.BlockSpec((1, 3, M), lambda b, t: (b, 0, 0)),
        ],
        out_specs=pl.BlockSpec((1, 1, 128), lambda b, t: (b, 0, 0)),
        out_shape=jax.ShapeDtypeStruct((B, 1, 128), jnp.float32),
        scratch_shapes=[
            pltpu.VMEM((1, M), jnp.float32),   # best d^2 per skeleton point
            pltpu.VMEM((1, M), jnp.float32),   # |dot| at the best neighbour
            pltpu.VMEM((1, M), jnp.float32),   # 2nd-best d^2
            pltpu.VMEM((1, M), jnp.float32),   # |dot| at the 2nd-best neighbour
            pltpu.VMEM((1, 1), jnp.float32),   # running sum of sqrt(min_m d^2)
        ],
        compiler_params=pltpu.CompilerParams(
            dimension_semantics=("parallel", "arbitrary"),
            vmem_limit_bytes=64 * 1024 * 1024,
        ),
    )(shape_f, skp_t, sko_t)

    comp = partials[:, 0, :]                                  # (B, 128)
    loss_cd = 1e-4 * (jnp.sum(comp[:, 0]) + jnp.sum(comp[:, 1]))
    loss_normal = jnp.sum(comp[:, 2]) / B
    return loss_cd + 1e-3 * loss_normal


def _reference_loss(shape_xyz, skel_xyz, skel_nori):
    """Pure-numpy reference mirroring the PyTorch forward."""
    pts = shape_xyz[:, :, :3].astype(np.float64)
    nrm = shape_xyz[:, :, 3:6].astype(np.float64)
    skp = skel_xyz.astype(np.float64)
    sko = skel_nori.astype(np.float64)
    B, N, _ = pts.shape
    M = skp.shape[1]
    loss_cd = 0.0
    loss_normal = 0.0
    for b in range(B):
        diff = skp[b][:, None, :] - pts[b][None, :, :]
        d = np.sqrt((diff ** 2).sum(-1))                      # (M, N)
        loss_cd += d.min(axis=0).sum() + d.min(axis=1).sum()
        d2 = d ** 2
        for j in range(M):
            row = d2[j].copy()
            i1 = int(row.argmin()); row[i1] = np.inf
            i2 = int(row.argmin())
            lj = abs(np.dot(sko[b, j], nrm[b, i1])) + abs(np.dot(sko[b, j], nrm[b, i2]))
            loss_normal += lj / 2.0
    loss_normal /= B
    return 1e-4 * loss_cd + 1e-3 * loss_normal


if __name__ == "__main__":
    key = jax.random.PRNGKey(0)
    k1, k2, k3 = jax.random.split(key, 3)
    B, N, M = 2, 256, 32
    shape_xyz = jax.random.normal(k1, (B, N, 6), dtype=jnp.float32)   # xyz + normal
    skel_xyz = jax.random.normal(k2, (B, M, 3), dtype=jnp.float32)
    skel_nori = jax.random.normal(k3, (B, M, 3), dtype=jnp.float32)

    # block_n=128 -> 2 N-tiles per batch, exercising the running top-2 accumulator path.
    loss = jax.block_until_ready(get_loss_pre(shape_xyz, skel_xyz, skel_nori, block_n=128))

    ref = _reference_loss(np.asarray(shape_xyz), np.asarray(skel_xyz), np.asarray(skel_nori))
    assert np.allclose(float(loss), ref, rtol=2e-4, atol=1e-5), (float(loss), ref)
    print("KERNEL_OK")
</pallas_src>

<mosaic_0001>
module attributes {stable_mosaic.version = 11 : i64} {
  func.func @_loss_pre_kernel(%arg0: i32, %arg1: i32, %arg2: memref<1x128x6xf32, #tpu.memory_space<vmem>>, %arg3: memref<1x3x32xf32, #tpu.memory_space<vmem>>, %arg4: memref<1x3x32xf32, #tpu.memory_space<vmem>>, %arg5: memref<1x1x128xf32, #tpu.memory_space<vmem>>, %arg6: memref<1x32xf32, #tpu.memory_space<vmem>>, %arg7: memref<1x32xf32, #tpu.memory_space<vmem>>, %arg8: memref<1x32xf32, #tpu.memory_space<vmem>>, %arg9: memref<1x32xf32, #tpu.memory_space<vmem>>, %arg10: memref<1x1xf32, #tpu.memory_space<vmem>>) attributes {dimension_semantics = [#tpu.dimension_semantics<parallel>, #tpu.dimension_semantics<arbitrary>], iteration_bounds = array<i64: 2, 2>, scalar_prefetch = 0 : i64, scratch_operands = 5 : i64, tpu.core_type = #tpu.core_type<tc>, window_params = [{transform_indices = @transform_0, window_bounds = array<i64: 1, 128, 6>}, {transform_indices = @transform_1, window_bounds = array<i64: 1, 3, 32>}, {transform_indices = @transform_2, window_bounds = array<i64: 1, 3, 32>}, {transform_indices = @transform_3, window_bounds = array<i64: 1, 1, 128>}]} {
    %c0_i32 = arith.constant 0 : i32
    %0 = arith.cmpi eq, %arg1, %c0_i32 : i32
    %1 = arith.extui %0 : i1 to i32
    %c0_i32_0 = arith.constant 0 : i32
    %2 = arith.cmpi ne, %1, %c0_i32_0 : i32
    scf.if %2 {
      %cst_47 = arith.constant 0x7F800000 : f32
      %95 = vector.broadcast %cst_47 : f32 to vector<1x32xf32>
      %c0_48 = arith.constant 0 : index
      %c0_49 = arith.constant 0 : index
      %96 = vector.load %arg6[%c0_48, %c0_49] : memref<1x32xf32, #tpu.memory_space<vmem>>, vector<1x32xf32>
      tpu.vector_store %arg6[%c0_48, %c0_49], %95 {strides = array<i32>} : memref<1x32xf32, #tpu.memory_space<vmem>>, vector<1x32xf32>,
      %cst_50 = arith.constant 0x7F800000 : f32
      %97 = vector.broadcast %cst_50 : f32 to vector<1x32xf32>
      %c0_51 = arith.constant 0 : index
      %c0_52 = arith.constant 0 : index
      %98 = vector.load %arg8[%c0_51, %c0_52] : memref<1x32xf32, #tpu.memory_space<vmem>>, vector<1x32xf32>
      tpu.vector_store %arg8[%c0_51, %c0_52], %97 {strides = array<i32>} : memref<1x32xf32, #tpu.memory_space<vmem>>, vector<1x32xf32>,
      %cst_53 = arith.constant 0.000000e+00 : f32
      %99 = vector.broadcast %cst_53 : f32 to vector<1x32xf32>
      %c0_54 = arith.constant 0 : index
      %c0_55 = arith.constant 0 : index
      %100 = vector.load %arg7[%c0_54, %c0_55] : memref<1x32xf32, #tpu.memory_space<vmem>>, vector<1x32xf32>
      tpu.vector_store %arg7[%c0_54, %c0_55], %99 {strides = array<i32>} : memref<1x32xf32, #tpu.memory_space<vmem>>, vector<1x32xf32>,
      %cst_56 = arith.constant 0.000000e+00 : f32
      %101 = vector.broadcast %cst_56 : f32 to vector<1x32xf32>
      %c0_57 = arith.constant 0 : index
      %c0_58 = arith.constant 0 : index
      %102 = vector.load %arg9[%c0_57, %c0_58] : memref<1x32xf32, #tpu.memory_space<vmem>>, vector<1x32xf32>
      tpu.vector_store %arg9[%c0_57, %c0_58], %101 {strides = array<i32>} : memref<1x32xf32, #tpu.memory_space<vmem>>, vector<1x32xf32>,
      %cst_59 = arith.constant 0.000000e+00 : f32
      %103 = vector.broadcast %cst_59 : f32 to vector<1x1xf32>
      %c0_60 = arith.constant 0 : index
      %c0_61 = arith.constant 0 : index
      %104 = vector.load %arg10[%c0_60, %c0_61] : memref<1x1xf32, #tpu.memory_space<vmem>>, vector<1x1xf32>
      tpu.vector_store %arg10[%c0_60, %c0_61], %103 {strides = array<i32>} : memref<1x1xf32, #tpu.memory_space<vmem>>, vector<1x1xf32>,
    } else {
    }
    %c0 = arith.constant 0 : index
    %c0_1 = arith.constant 0 : index
    %c0_2 = arith.constant 0 : index
    %3 = vector.load %arg2[%c0, %c0_1, %c0_2] : memref<1x128x6xf32, #tpu.memory_space<vmem>>, vector<1x128x6xf32>
    %4 = vector.shape_cast %3 : vector<1x128x6xf32> to vector<128x6xf32>
    %c0_3 = arith.constant 0 : index
    %c0_4 = arith.constant 0 : index
    %c0_5 = arith.constant 0 : index
    %5 = vector.load %arg3[%c0_3, %c0_4, %c0_5] : memref<1x3x32xf32, #tpu.memory_space<vmem>>, vector<1x3x32xf32>
    %6 = vector.shape_cast %5 : vector<1x3x32xf32> to vector<3x32xf32>
    %c0_6 = arith.constant 0 : index
    %c0_7 = arith.constant 0 : index
    %c0_8 = arith.constant 0 : index
    %7 = vector.load %arg4[%c0_6, %c0_7, %c0_8] : memref<1x3x32xf32, #tpu.memory_space<vmem>>, vector<1x3x32xf32>
    %8 = vector.shape_cast %7 : vector<1x3x32xf32> to vector<3x32xf32>
    %9 = vector.extract_strided_slice %4 {offsets = [0, 0], sizes = [128, 3], strides = [1, 1]} : vector<128x6xf32> to vector<128x3xf32>
    %10 = vector.extract_strided_slice %4 {offsets = [0, 3], sizes = [128, 3], strides = [1, 1]} : vector<128x6xf32> to vector<128x3xf32>
    %cst = arith.constant dense<0.000000e+00> : vector<128x32xf32>
    %11 = tpu.matmul %9, %6, %cst {dimension_numbers = #tpu.dot_dimension_numbers<[1], [0], [0], [1], [0, 0, 1, 1], [], []>} : vector<128x3xf32>, vector<3x32xf32>, vector<128x32xf32> -> vector<128x32xf32>
    %12 = arith.mulf %9, %9 : vector<128x3xf32>
    %cst_9 = arith.constant dense<0.000000e+00> : vector<128xf32>
    %13 = vector.multi_reduction <add>, %12, %cst_9 [1] : vector<128x3xf32> to vector<128xf32>
    %14 = vector.shape_cast %13 : vector<128xf32> to vector<128x1xf32>
    %15 = arith.mulf %6, %6 : vector<3x32xf32>
    %cst_10 = arith.constant dense<0.000000e+00> : vector<32xf32>
    %16 = vector.multi_reduction <add>, %15, %cst_10 [0] : vector<3x32xf32> to vector<32xf32>
    %17 = vector.shape_cast %16 : vector<32xf32> to vector<1x32xf32>
    %18 = vector.broadcast %14 : vector<128x1xf32> to vector<128x32xf32>
    %19 = vector.broadcast %17 : vector<1x32xf32> to vector<128x32xf32>
    %20 = arith.addf %18, %19 : vector<128x32xf32>
    %cst_11 = arith.constant 2.000000e+00 : f32
    %21 = vector.broadcast %cst_11 : f32 to vector<128x32xf32>
    %22 = arith.mulf %21, %11 : vector<128x32xf32>
    %23 = arith.subf %20, %22 : vector<128x32xf32>
    %cst_12 = arith.constant 0.000000e+00 : f32
    %24 = vector.broadcast %cst_12 : f32 to vector<128x32xf32>
    %25 = arith.maximumf %23, %24 : vector<128x32xf32>
    %cst_13 = arith.constant dense<0.000000e+00> : vector<128x32xf32>
    %26 = tpu.matmul %10, %8, %cst_13 {dimension_numbers = #tpu.dot_dimension_numbers<[1], [0], [0], [1], [0, 0, 1, 1], [], []>} : vector<128x3xf32>, vector<3x32xf32>, vector<128x32xf32> -> vector<128x32xf32>
    %27 = math.absf %26 : vector<128x32xf32>
    %c0_14 = arith.constant 0 : index
    %c0_15 = arith.constant 0 : index
    %28 = vector.load %arg10[%c0_14, %c0_15] : memref<1x1xf32, #tpu.memory_space<vmem>>, vector<1x1xf32>
    %cst_16 = arith.constant dense<0x7F800000> : vector<128xf32>
    %29 = vector.multi_reduction <minimumf>, %25, %cst_16 [1] : vector<128x32xf32> to vector<128xf32>
    %30 = vector.shape_cast %29 : vector<128xf32> to vector<128x1xf32>
    %31 = math.sqrt %30 : vector<128x1xf32>
    %32 = vector.shape_cast %31 : vector<128x1xf32> to vector<1x128x1xf32>
    %cst_17 = arith.constant dense<0.000000e+00> : vector<1xf32>
    %33 = vector.multi_reduction <add>, %32, %cst_17 [1, 2] : vector<1x128x1xf32> to vector<1xf32>
    %34 = vector.shape_cast %33 : vector<1xf32> to vector<1x1x1xf32>
    %35 = vector.extract %34[0, 0, 0] : f32 from vector<1x1x1xf32>
    %36 = vector.broadcast %35 : f32 to vector<1x1xf32>
    %37 = arith.addf %28, %36 : vector<1x1xf32>
    %c0_18 = arith.constant 0 : index
    %c0_19 = arith.constant 0 : index
    %38 = vector.load %arg10[%c0_18, %c0_19] : memref<1x1xf32, #tpu.memory_space<vmem>>, vector<1x1xf32>
    tpu.vector_store %arg10[%c0_18, %c0_19], %37 {strides = array<i32>} : memref<1x1xf32, #tpu.memory_space<vmem>>, vector<1x1xf32>,
    %39 = tpu.iota {dimensions = array<i32: 0>} : vector<128x32xi32>
    %c128_i32 = arith.constant 128 : i32
    %40 = arith.muli %arg1, %c128_i32 : i32
    %41 = vector.broadcast %40 : i32 to vector<128x32xi32>
    %42 = arith.addi %39, %41 : vector<128x32xi32>
    %cst_20 = arith.constant dense<0x7F800000> : vector<32xf32>
    %43 = vector.multi_reduction <minimumf>, %25, %cst_20 [0] : vector<128x32xf32> to vector<32xf32>
    %44 = vector.shape_cast %43 : vector<32xf32> to vector<1x32xf32>
    %45 = vector.broadcast %44 : vector<1x32xf32> to vector<128x32xf32>
    %46 = arith.cmpf oeq, %25, %45 : vector<128x32xf32>
    %c2147483647_i32 = arith.constant 2147483647 : i32
    %47 = vector.broadcast %c2147483647_i32 : i32 to vector<128x32xi32>
    %48 = arith.select %46, %42, %47 : vector<128x32xi1>, vector<128x32xi32>
    %cst_21 = arith.constant dense<2147483647> : vector<32xi32>
    %49 = vector.multi_reduction <minsi>, %48, %cst_21 [0] : vector<128x32xi32> to vector<32xi32>
    %50 = vector.shape_cast %49 : vector<32xi32> to vector<1x32xi32>
    %51 = vector.broadcast %50 : vector<1x32xi32> to vector<128x32xi32>
    %52 = arith.cmpi eq, %42, %51 : vector<128x32xi32>
    %cst_22 = arith.constant 0.000000e+00 : f32
    %53 = vector.broadcast %cst_22 : f32 to vector<128x32xf32>
    %54 = arith.select %52, %27, %53 : vector<128x32xi1>, vector<128x32xf32>
    %cst_23 = arith.constant dense<0.000000e+00> : vector<32xf32>
    %55 = vector.multi_reduction <add>, %54, %cst_23 [0] : vector<128x32xf32> to vector<32xf32>
    %56 = vector.shape_cast %55 : vector<32xf32> to vector<1x32xf32>
    %cst_24 = arith.constant 0x7F800000 : f32
    %57 = vector.broadcast %cst_24 : f32 to vector<128x32xf32>
    %58 = arith.select %52, %57, %25 : vector<128x32xi1>, vector<128x32xf32>
    %cst_25 = arith.constant dense<0x7F800000> : vector<32xf32>
    %59 = vector.multi_reduction <minimumf>, %58, %cst_25 [0] : vector<128x32xf32> to vector<32xf32>
    %60 = vector.shape_cast %59 : vector<32xf32> to vector<1x32xf32>
    %61 = vector.broadcast %60 : vector<1x32xf32> to vector<128x32xf32>
    %62 = arith.cmpf oeq, %58, %61 : vector<128x32xf32>
    %c2147483647_i32_26 = arith.constant 2147483647 : i32
    %63 = vector.broadcast %c2147483647_i32_26 : i32 to vector<128x32xi32>
    %64 = arith.select %62, %42, %63 : vector<128x32xi1>, vector<128x32xi32>
    %cst_27 = arith.constant dense<2147483647> : vector<32xi32>
    %65 = vector.multi_reduction <minsi>, %64, %cst_27 [0] : vector<128x32xi32> to vector<32xi32>
    %66 = vector.shape_cast %65 : vector<32xi32> to vector<1x32xi32>
    %67 = vector.broadcast %66 : vector<1x32xi32> to vector<128x32xi32>
    %68 = arith.cmpi eq, %42, %67 : vector<128x32xi32>
    %cst_28 = arith.constant 0.000000e+00 : f32
    %69 = vector.broadcast %cst_28 : f32 to vector<128x32xf32>
    %70 = arith.select %68, %27, %69 : vector<128x32xi1>, vector<128x32xf32>
    %cst_29 = arith.constant dense<0.000000e+00> : vector<32xf32>
    %71 = vector.multi_reduction <add>, %70, %cst_29 [0] : vector<128x32xf32> to vector<32xf32>
    %72 = vector.shape_cast %71 : vector<32xf32> to vector<1x32xf32>
    %c0_30 = arith.constant 0 : index
    %c0_31 = arith.constant 0 : index
    %73 = vector.load %arg6[%c0_30, %c0_31] : memref<1x32xf32, #tpu.memory_space<vmem>>, vector<1x32xf32>
    %c0_32 = arith.constant 0 : index
    %c0_33 = arith.constant 0 : index
    %74 = vector.load %arg7[%c0_32, %c0_33] : memref<1x32xf32, #tpu.memory_space<vmem>>, vector<1x32xf32>
    %c0_34 = arith.constant 0 : index
    %c0_35 = arith.constant 0 : index
    %75 = vector.load %arg8[%c0_34, %c0_35] : memref<1x32xf32, #tpu.memory_space<vmem>>, vector<1x32xf32>
    %c0_36 = arith.constant 0 : index
    %c0_37 = arith.constant 0 : index
    %76 = vector.load %arg9[%c0_36, %c0_37] : memref<1x32xf32, #tpu.memory_space<vmem>>, vector<1x32xf32>
    %77 = arith.cmpf olt, %44, %73 : vector<1x32xf32>
    %78 = arith.select %77, %44, %73 : vector<1x32xi1>, vector<1x32xf32>
    %79 = arith.select %77, %56, %74 : vector<1x32xi1>, vector<1x32xf32>
    %80 = arith.select %77, %73, %44 : vector<1x32xi1>, vector<1x32xf32>
    %81 = arith.select %77, %74, %56 : vector<1x32xi1>, vector<1x32xf32>
    %82 = arith.cmpf olt, %80, %75 : vector<1x32xf32>
    %83 = arith.select %82, %80, %75 : vector<1x32xi1>, vector<1x32xf32>
    %84 = arith.select %82, %81, %76 : vector<1x32xi1>, vector<1x32xf32>
    %85 = arith.cmpf olt, %60, %83 : vector<1x32xf32>
    %86 = arith.select %85, %60, %83 : vector<1x32xi1>, vector<1x32xf32>
    %87 = arith.select %85, %72, %84 : vector<1x32xi1>, vector<1x32xf32>
    %c0_38 = arith.constant 0 : index
    %c0_39 = arith.constant 0 : index
    %88 = vector.load %arg6[%c0_38, %c0_39] : memref<1x32xf32, #tpu.memory_space<vmem>>, vector<1x32xf32>
    tpu.vector_store %arg6[%c0_38, %c0_39], %78 {strides = array<i32>} : memref<1x32xf32, #tpu.memory_space<vmem>>, vector<1x32xf32>,
    %c0_40 = arith.constant 0 : index
    %c0_41 = arith.constant 0 : index
    %89 = vector.load %arg7[%c0_40, %c0_41] : memref<1x32xf32, #tpu.memory_space<vmem>>, vector<1x32xf32>
    tpu.vector_store %arg7[%c0_40, %c0_41], %79 {strides = array<i32>} : memref<1x32xf32, #tpu.memory_space<vmem>>, vector<1x32xf32>,
    %c0_42 = arith.constant 0 : index
    %c0_43 = arith.constant 0 : index
    %90 = vector.load %arg8[%c0_42, %c0_43] : memref<1x32xf32, #tpu.memory_space<vmem>>, vector<1x32xf32>
    tpu.vector_store %arg8[%c0_42, %c0_43], %86 {strides = array<i32>} : memref<1x32xf32, #tpu.memory_space<vmem>>, vector<1x32xf32>,
    %c0_44 = arith.constant 0 : index
    %c0_45 = arith.constant 0 : index
    %91 = vector.load %arg9[%c0_44, %c0_45] : memref<1x32xf32, #tpu.memory_space<vmem>>, vector<1x32xf32>
    tpu.vector_store %arg9[%c0_44, %c0_45], %87 {strides = array<i32>} : memref<1x32xf32, #tpu.memory_space<vmem>>, vector<1x32xf32>,
    %c1_i32 = arith.constant 1 : i32
    %92 = arith.cmpi eq, %arg1, %c1_i32 : i32
    %93 = arith.extui %92 : i1 to i32
    %c0_i32_46 = arith.constant 0 : i32
    %94 = arith.cmpi ne, %93, %c0_i32_46 : i32
    scf.if %94 {
      %c0_47 = arith.constant 0 : index
      %c0_48 = arith.constant 0 : index
      %95 = vector.load %arg10[%c0_47, %c0_48] : memref<1x1xf32, #tpu.memory_space<vmem>>, vector<1x1xf32>
      %c0_49 = arith.constant 0 : index
      %c0_50 = arith.constant 0 : index
      %96 = vector.load %arg6[%c0_49, %c0_50] : memref<1x32xf32, #tpu.memory_space<vmem>>, vector<1x32xf32>
      %97 = math.sqrt %96 : vector<1x32xf32>
      %98 = vector.shape_cast %97 : vector<1x32xf32> to vector<1x1x32xf32>
      %cst_51 = arith.constant dense<0.000000e+00> : vector<1xf32>
      %99 = vector.multi_reduction <add>, %98, %cst_51 [1, 2] : vector<1x1x32xf32> to vector<1xf32>
      %100 = vector.shape_cast %99 : vector<1xf32> to vector<1x1x1xf32>
      %101 = vector.extract %100[0, 0, 0] : f32 from vector<1x1x1xf32>
      %c0_52 = arith.constant 0 : index
      %c0_53 = arith.constant 0 : index
      %102 = vector.load %arg7[%c0_52, %c0_53] : memref<1x32xf32, #tpu.memory_space<vmem>>, vector<1x32xf32>
      %c0_54 = arith.constant 0 : index
      %c0_55 = arith.constant 0 : index
      %103 = vector.load %arg9[%c0_54, %c0_55] : memref<1x32xf32, #tpu.memory_space<vmem>>, vector<1x32xf32>
      %104 = arith.addf %102, %103 : vector<1x32xf32>
      %105 = vector.shape_cast %104 : vector<1x32xf32> to vector<1x1x32xf32>
      %cst_56 = arith.constant dense<0.000000e+00> : vector<1xf32>
      %106 = vector.multi_reduction <add>, %105, %cst_56 [1, 2] : vector<1x1x32xf32> to vector<1xf32>
      %107 = vector.shape_cast %106 : vector<1xf32> to vector<1x1x1xf32>
      %108 = vector.extract %107[0, 0, 0] : f32 from vector<1x1x1xf32>
      %cst_57 = arith.constant 5.000000e-01 : f32
      %109 = arith.mulf %cst_57, %108 : f32
      %110 = tpu.iota {dimensions = array<i32: 1>} : vector<1x128xi32>
      %c0_i32_58 = arith.constant 0 : i32
      %111 = vector.broadcast %c0_i32_58 : i32 to vector<1x128xi32>
      %112 = arith.cmpi eq, %110, %111 : vector<1x128xi32>
      %cst_59 = arith.constant 0.000000e+00 : f32
      %113 = vector.shape_cast %95 : vector<1x1xf32> to vector<1x1xf32>
      %114 = vector.broadcast %113 : vector<1x1xf32> to vector<1x128xf32>
      %115 = vector.broadcast %cst_59 : f32 to vector<1x128xf32>
      %116 = arith.select %112, %114, %115 : vector<1x128xi1>, vector<1x128xf32>
      %c1_i32_60 = arith.constant 1 : i32
      %117 = vector.broadcast %c1_i32_60 : i32 to vector<1x128xi32>
      %118 = arith.cmpi eq, %110, %117 : vector<1x128xi32>
      %cst_61 = arith.constant 0.000000e+00 : f32
      %119 = vector.broadcast %101 : f32 to vector<1x128xf32>
      %120 = vector.broadcast %cst_61 : f32 to vector<1x128xf32>
      %121 = arith.select %118, %119, %120 : vector<1x128xi1>, vector<1x128xf32>
      %122 = arith.addf %116, %121 : vector<1x128xf32>
      %c2_i32 = arith.constant 2 : i32
      %123 = vector.broadcast %c2_i32 : i32 to vector<1x128xi32>
      %124 = arith.cmpi eq, %110, %123 : vector<1x128xi32>
      %cst_62 = arith.constant 0.000000e+00 : f32
      %125 = vector.broadcast %109 : f32 to vector<1x128xf32>
      %126 = vector.broadcast %cst_62 : f32 to vector<1x128xf32>
      %127 = arith.select %124, %125, %126 : vector<1x128xi1>, vector<1x128xf32>
      %128 = arith.addf %122, %127 : vector<1x128xf32>
      %c0_63 = arith.constant 0 : index
      %c0_64 = arith.constant 0 : index
      %c0_65 = arith.constant 0 : index
      %129 = vector.load %arg5[%c0_63, %c0_64, %c0_65] : memref<1x1x128xf32, #tpu.memory_space<vmem>>, vector<1x1x128xf32>
      %130 = vector.shape_cast %129 : vector<1x1x128xf32> to vector<1x128xf32>
      %131 = vector.shape_cast %128 : vector<1x128xf32> to vector<1x1x128xf32>
      tpu.vector_store %arg5[%c0_63, %c0_64, %c0_65], %131 {strides = array<i32>} : memref<1x1x128xf32, #tpu.memory_space<vmem>>, vector<1x1x128xf32>,
    } else {
    }
    return
  }
  func.func @transform_0(%arg0: i32, %arg1: i32) -> (i32, i32, i32) {
    %c0_i32 = arith.constant 0 : i32
    %c0_i32_0 = arith.constant 0 : i32
    return %arg0, %arg1, %c0_i32 : i32, i32, i32
  }
  func.func @transform_1(%arg0: i32, %arg1: i32) -> (i32, i32, i32) {
    %c0_i32 = arith.constant 0 : i32
    %c0_i32_0 = arith.constant 0 : i32
    %c0_i32_1 = arith.constant 0 : i32
    return %arg0, %c0_i32, %c0_i32_0 : i32, i32, i32
  }
  func.func @transform_2(%arg0: i32, %arg1: i32) -> (i32, i32, i32) {
    %c0_i32 = arith.constant 0 : i32
    %c0_i32_0 = arith.constant 0 : i32
    %c0_i32_1 = arith.constant 0 : i32
    return %arg0, %c0_i32, %c0_i32_0 : i32, i32, i32
  }
  func.func @transform_3(%arg0: i32, %arg1: i32) -> (i32, i32, i32) {
    %c0_i32 = arith.constant 0 : i32
    %c0_i32_0 = arith.constant 0 : i32
    %c0_i32_1 = arith.constant 0 : i32
    return %arg0, %c0_i32, %c0_i32_0 : i32, i32, i32
  }
}

</mosaic_0001>

<llo_original>
// kernel: tpu_custom_call.1
$region0: #{tpu_custom_call.1}
  #allocation0 [shape = 'u32[]', space=smem, size = 0x4, offset = 0x4, fixed_abs, tag = 'smem constant byte address 0x4 - core index']
  #allocation1 [shape = 'u32[144,128]{1,0:T(1,128)}', space=vmem, size = 0x12000, scoped, tag = 'internal scratch']
  #allocation2 [shape = 'f32[1,32]{1,0:T(1,128)}', space=vmem, size = 0x200, scoped, tag = 'scratch operand']
  #allocation3 [shape = 'f32[1,32]{1,0:T(1,128)}', space=vmem, size = 0x200, scoped, tag = 'scratch operand']
  #allocation4 [shape = 'f32[1,32]{1,0:T(1,128)}', space=vmem, size = 0x200, scoped, tag = 'scratch operand']
  #allocation5 [shape = 'f32[1,32]{1,0:T(1,128)}', space=vmem, size = 0x200, scoped, tag = 'scratch operand']
  #allocation6 [shape = 'f32[1,1]{1,0:T(1,128)}', space=vmem, size = 0x200, scoped, tag = 'scratch operand']
  %s0 = inlined_call_operand.hbm [shape: f32[2,256,6], index: 0, kind: input, shape index: {}]
  %s1 = inlined_call_operand.hbm [shape: f32[2,3,32], index: 1, kind: input, shape index: {}]
  %s2 = inlined_call_operand.hbm [shape: f32[2,3,32], index: 2, kind: input, shape index: {}]
  %s3 = inlined_call_operand.hbm [shape: f32[2,1,128], index: 3, kind: output, shape index: {}]
  %s4 = sld [smem:[#allocation0]]
  $region65: #{tpu_custom_call.1} parent=0
    _
  %s6 = ssub.s32 1, %s4
  %s7 = scalar_select 0, %s6, %s4
  $region1: #{tpu_custom_call.1} parent=0
    #allocation7 [shape = 'u8[131072]{0}', space=vmem, size = 0x20000, scoped, tag = 'input window, operand 0']
    #allocation8 [shape = 's32[2]{0}', space=sflag, size = 0x8, scoped, tag = 'scoped memory for tpu_custom_call.1']
    #allocation9 [shape = 's32[2]{0}', space=sflag, size = 0x8, scoped, tag = 'scoped memory for tpu_custom_call.1']
    #allocation10 [shape = 'u8[4096]{0}', space=vmem, size = 0x1000, scoped, tag = 'input window, operand 1']
    #allocation11 [shape = 's32[2]{0}', space=sflag, size = 0x8, scoped, tag = 'scoped memory for tpu_custom_call.1']
    #allocation12 [shape = 'u8[4096]{0}', space=vmem, size = 0x1000, scoped, tag = 'input window, operand 2']
    #allocation13 [shape = 'u8[1024]{0}', space=vmem, size = 0x400, scoped, tag = 'output window, operand 0']
    %8 = vsyncpa [#allocation8], 0
    %s9 = scalar_lea.sflag [#allocation8], 1
    %10 = vsyncpa %s9, 0
    %11 = vsyncpa [#allocation11], 0
    %s12 = scalar_lea.sflag [#allocation11], 1
    %13 = vsyncpa %s12, 0
    %14 = vsyncpa [#allocation9], 0
    %s15 = scalar_lea.sflag [#allocation9], 1
    %16 = vsyncpa %s15, 0
    loop: start=0, step=1, limit=6
    $region2: #{tpu_custom_call.1} parent=1 // loop_pre_header
      _
    $region3: #{tpu_custom_call.1} parent=1 // loop_header
      %s18 = sphi 0, %s22
      %p19 = scmp.ge.s32.totalorder %s18, 6
      %s25 = sphi 0, %s37
      %s26 = sphi 0, %s33
      %s27 = sphi 0, %s25
      %s28 = sphi 0, %s26
      %s29 = sphi 0, %s27
      %s30 = sphi 0, %s28
      %s42 = sphi 0, %s44
      %s45 = sphi 0, %s42
      %s46 = sphi 0, %s45
      %s62 = sphi 0, %s46
      %s68 = sphi 0, %s70
      %s71 = sphi 0, %s68
      %s72 = sphi 0, %s71
      %s88 = sphi 0, %s72
      %s94 = sphi 0, %s96
      %s97 = sphi 0, %s94
      %s98 = sphi 0, %s97
      %s114 = sphi 0, %s98
      %s120 = sphi 0, %s122
      %s123 = sphi 0, %s120
      %s124 = sphi 0, %s123
      %s140 = sphi 0, %s124
    $region4: #{tpu_custom_call.1} parent=1 // loop_header_branch
      %21 = sbr.rel (%p19) target = $region8
    $region5: #{tpu_custom_call.1} parent=1 // loop_body
      %s23 = ssub.s32 %s18, 1
      %s24 = ssub.s32 %s18, 2
      %s31 = sadd.s32 1, %s26
      %p32 = scmp.ge.s32.totalorder %s31, 2
      %s33 = scalar_select %p32, 0, %s31
      %s34 = sadd.s32 1, %s25
      %s35 = scalar_select %p32, %s34, %s25
      %p36 = scmp.ge.s32.totalorder %s35, 2
      %s37 = scalar_select %p36, 0, %s35
      %s38 = ssub.s32 %s25, %s37
      %s39 = ssub.s32 %s26, %s33
      %s40 = sor.u32 %s38, %s39
      %p41 = scmp.eq.s32.totalorder %s40, 0
      %s43 = sadd.s32 %s42, 1
      %s44 = scalar_select %p41, %s42, %s43
      %p47 = pneg %p41
      %p48 = scmp.eq.s32.totalorder %s18, 3
      %p49 = por %p47, %p48
      %p50 = scmp.ne.s32.totalorder %s42, %s45
      %p51 = scmp.eq.s32.totalorder %s18, 0
      %p52 = por %p50, %p51
      %p53 = scmp.ne.s32.totalorder %s42, %s45
      %p54 = scmp.eq.s32.totalorder %s23, 3
      %p55 = por %p53, %p54
      %p56 = scmp.ne.s32.totalorder %s45, %s46
      %p57 = scmp.eq.s32.totalorder %s23, 0
      %p58 = por %p56, %p57
      %p59 = scmp.ne.s32.totalorder %s45, %s46
      %p60 = scmp.eq.s32.totalorder %s24, 3
      %p61 = por %p59, %p60
      %p63 = scmp.ne.s32.totalorder %s46, %s62
      %p64 = scmp.eq.s32.totalorder %s24, 0
      %p65 = por %p63, %p64
      %s66 = ssub.s32 %s25, %s37
      %p67 = scmp.eq.s32.totalorder %s66, 0
      %s69 = sadd.s32 %s68, 1
      %s70 = scalar_select %p67, %s68, %s69
      %p73 = pneg %p67
      %p74 = scmp.eq.s32.totalorder %s18, 3
      %p75 = por %p73, %p74
      %p76 = scmp.ne.s32.totalorder %s68, %s71
      %p77 = scmp.eq.s32.totalorder %s18, 0
      %p78 = por %p76, %p77
      %p79 = scmp.ne.s32.totalorder %s68, %s71
      %p80 = scmp.eq.s32.totalorder %s23, 3
      %p81 = por %p79, %p80
      %p82 = scmp.ne.s32.totalorder %s71, %s72
      %p83 = scmp.eq.s32.totalorder %s23, 0
      %p84 = por %p82, %p83
      %p85 = scmp.ne.s32.totalorder %s71, %s72
      %p86 = scmp.eq.s32.totalorder %s24, 3
      %p87 = por %p85, %p86
      %p89 = scmp.ne.s32.totalorder %s72, %s88
      %p90 = scmp.eq.s32.totalorder %s24, 0
      %p91 = por %p89, %p90
      %s92 = ssub.s32 %s25, %s37
      %p93 = scmp.eq.s32.totalorder %s92, 0
      %s95 = sadd.s32 %s94, 1
      %s96 = scalar_select %p93, %s94, %s95
      %p99 = pneg %p93
      %p100 = scmp.eq.s32.totalorder %s18, 3
      %p101 = por %p99, %p100
      %p102 = scmp.ne.s32.totalorder %s94, %s97
      %p103 = scmp.eq.s32.totalorder %s18, 0
      %p104 = por %p102, %p103
      %p105 = scmp.ne.s32.totalorder %s94, %s97
      %p106 = scmp.eq.s32.totalorder %s23, 3
      %p107 = por %p105, %p106
      %p108 = scmp.ne.s32.totalorder %s97, %s98
      %p109 = scmp.eq.s32.totalorder %s23, 0
      %p110 = por %p108, %p109
      %p111 = scmp.ne.s32.totalorder %s97, %s98
      %p112 = scmp.eq.s32.totalorder %s24, 3
      %p113 = por %p111, %p112
      %p115 = scmp.ne.s32.totalorder %s98, %s114
      %p116 = scmp.eq.s32.totalorder %s24, 0
      %p117 = por %p115, %p116
      %s118 = ssub.s32 %s25, %s37
      %p119 = scmp.eq.s32.totalorder %s118, 0
      %s121 = sadd.s32 %s120, 1
      %s122 = scalar_select %p119, %s120, %s121
      %p125 = pneg %p119
      %p126 = scmp.eq.s32.totalorder %s18, 3
      %p127 = por %p125, %p126
      %p128 = scmp.ne.s32.totalorder %s120, %s123
      %p129 = scmp.eq.s32.totalorder %s18, 0
      %p130 = por %p128, %p129
      %p131 = scmp.ne.s32.totalorder %s120, %s123
      %p132 = scmp.eq.s32.totalorder %s23, 3
      %p133 = por %p131, %p132
      %p134 = scmp.ne.s32.totalorder %s123, %s124
      %p135 = scmp.eq.s32.totalorder %s23, 0
      %p136 = por %p134, %p135
      %p137 = scmp.ne.s32.totalorder %s123, %s124
      %p138 = scmp.eq.s32.totalorder %s24, 3
      %p139 = por %p137, %p138
      %p141 = scmp.ne.s32.totalorder %s124, %s140
      %p142 = scmp.eq.s32.totalorder %s24, 0
      %p143 = por %p141, %p142
      %p144 = scmp.le.s32.totalorder 1, %s18
      %p145 = scmp.lt.s32.totalorder %s18, 5
      %p146 = pnand %p144, %p145
      %p147 = pneg %p146
      // Predicated region
      $region9: #{tpu_custom_call.1} parent=5 // pred_check
        _
      $region10: #{tpu_custom_call.1} parent=5 // pred_check_branch
        %149 = sbr.rel (%p146) target = $region12
      $region11: #{tpu_custom_call.1} parent=5 // pred_region
        %s150 = ssub.s32 %s18, 1
      $region12: #{tpu_custom_call.1} parent=5 // pred_fallthru
        _
      %p151 = scmp.lt.s32.totalorder %s18, 4
      // Predicated region
      $region13: #{tpu_custom_call.1} parent=5 // pred_check
        %p152 = pneg %p151
      $region14: #{tpu_custom_call.1} parent=5 // pred_check_branch
        %154 = sbr.rel (%p152) target = $region16
      $region15: #{tpu_custom_call.1} parent=5 // pred_region
        // Predicated region
        $region17: #{tpu_custom_call.1} parent=15 // pred_check
          %p155 = pneg %p52
        $region18: #{tpu_custom_call.1} parent=15 // pred_check_branch
          %157 = sbr.rel (%p155) target = $region20
        $region19: #{tpu_custom_call.1} parent=15 // pred_region
          %s158 = sand.u32 %s42, 1
          %s159 = scalar_lea.sflag [#allocation8], %s158
          %s160 = sand.u32 %s42, 1
          %s161 = smul.addr %s160, 128
          %s162 = scalar_lea.vmem [#allocation7], %s161
          %s163 = smul.u32 16, %s26
          %s165 = ssub.s32 2048, 2048
          %166 = vsyncadd %s159, %s165
          %s167 = smul.addr %s25, 32
          %s168 = sadd.s32 %s163, %s167
          %s169 = smul.addr %s168, 128
          %s170 = scalar_lea.hbm %s0, %s169
          %s171 = sshll.u32 %s162, 4
          %s172 = int_to_ptr.vmem [resolvable:$true] %s171
          %177 = dma.hbm_to_vmem [thread:$0]  %s170, 2048, %s172, %s159, 128, 128, 8
        $region20: #{tpu_custom_call.1} parent=15 // pred_fallthru
          _
        // Predicated region
        $region21: #{tpu_custom_call.1} parent=15 // pred_check
          %p178 = pneg %p78
        $region22: #{tpu_custom_call.1} parent=15 // pred_check_branch
          %180 = sbr.rel (%p178) target = $region24
        $region23: #{tpu_custom_call.1} parent=15 // pred_region
          %s181 = sand.u32 %s18, 1
          %s182 = scalar_lea.sflag [#allocation11], %s181
          %s183 = sand.u32 %s68, 1
          %s184 = smul.addr %s183, 4
          %s185 = scalar_lea.vmem [#allocation10], %s184
          %s187 = ssub.s32 64, 64
          %188 = vsyncadd %s182, %s187
          %s189 = smul.addr %s25, 64
          %s190 = scalar_lea.hbm %s1, %s189
          %s192 = sshll.u32 %s185, 4
          %s193 = int_to_ptr.vmem [resolvable:$true] %s192
          %195 = dma.hbm_to_vmem [thread:$0]  %s190, 64, %s193, %s182
        $region24: #{tpu_custom_call.1} parent=15 // pred_fallthru
          _
        // Predicated region
        $region25: #{tpu_custom_call.1} parent=15 // pred_check
          %p196 = pneg %p104
        $region26: #{tpu_custom_call.1} parent=15 // pred_check_branch
          %198 = sbr.rel (%p196) target = $region28
        $region27: #{tpu_custom_call.1} parent=15 // pred_region
          %s199 = sand.u32 %s18, 1
          %s200 = scalar_lea.sflag [#allocation11], %s199
          %s201 = sand.u32 %s94, 1
          %s202 = smul.addr %s201, 4
          %s203 = scalar_lea.vmem [#allocation12], %s202
          %s205 = ssub.s32 64, 64
          %206 = vsyncadd %s200, %s205
          %s207 = smul.addr %s25, 64
          %s208 = scalar_lea.hbm %s2, %s207
          %s210 = sshll.u32 %s203, 4
          %s211 = int_to_ptr.vmem [resolvable:$true] %s210
          %213 = dma.hbm_to_vmem [thread:$0]  %s208, 64, %s211, %s200
        $region28: #{tpu_custom_call.1} parent=15 // pred_fallthru
          _
      $region16: #{tpu_custom_call.1} parent=5 // pred_fallthru
        _
      %p214 = scmp.le.s32.totalorder 1, %s18
      %p215 = scmp.lt.s32.totalorder %s18, 5
      %p216 = pnand %p214, %p215
      %p217 = pneg %p216
      // Predicated region
      $region29: #{tpu_custom_call.1} parent=5 // pred_check
        _
      $region30: #{tpu_custom_call.1} parent=5 // pred_check_branch
        %219 = sbr.rel (%p216) target = $region32
      $region31: #{tpu_custom_call.1} parent=5 // pred_region
        %s220 = ssub.s32 %s18, 1
        %s221 = sand.u32 %s45, 1
        %s222 = scalar_lea.sflag [#allocation8], %s221
        %s223 = sand.u32 %s45, 1
        %s224 = smul.addr %s223, 128
        %s225 = scalar_lea.vmem [#allocation7], %s224
        // Predicated region
        $region33: #{tpu_custom_call.1} parent=31 // pred_check
          %p226 = pneg %p58
        $region34: #{tpu_custom_call.1} parent=31 // pred_check_branch
          %228 = sbr.rel (%p226) target = $region36
        $region35: #{tpu_custom_call.1} parent=31 // pred_region
          %229 = dma.done %s222, 2048
        $region36: #{tpu_custom_call.1} parent=31 // pred_fallthru
          _
        %s230 = sand.u32 %s23, 1
        %s231 = scalar_lea.sflag [#allocation11], %s230
        %s232 = sand.u32 %s71, 1
        %s233 = smul.addr %s232, 4
        %s234 = scalar_lea.vmem [#allocation10], %s233
        // Predicated region
        $region37: #{tpu_custom_call.1} parent=31 // pred_check
          %p235 = pneg %p84
        $region38: #{tpu_custom_call.1} parent=31 // pred_check_branch
          %237 = sbr.rel (%p235) target = $region40
        $region39: #{tpu_custom_call.1} parent=31 // pred_region
          %238 = dma.done %s231, 64
        $region40: #{tpu_custom_call.1} parent=31 // pred_fallthru
          _
        %s239 = sand.u32 %s23, 1
        %s240 = scalar_lea.sflag [#allocation11], %s239
        %s241 = sand.u32 %s97, 1
        %s242 = smul.addr %s241, 4
        %s243 = scalar_lea.vmem [#allocation12], %s242
        // Predicated region
        $region41: #{tpu_custom_call.1} parent=31 // pred_check
          %p244 = pneg %p110
        $region42: #{tpu_custom_call.1} parent=31 // pred_check_branch
          %246 = sbr.rel (%p244) target = $region44
        $region43: #{tpu_custom_call.1} parent=31 // pred_region
          %247 = dma.done %s240, 64
        $region44: #{tpu_custom_call.1} parent=31 // pred_fallthru
          _
        %s248 = sand.u32 %s45, 1
        %s249 = scalar_lea.sflag [#allocation8], %s248
        %s250 = sand.u32 %s45, 1
        %s251 = smul.addr %s250, 128
        %s252 = scalar_lea.vmem [#allocation7], %s251
        %p253 = pneg %p58
        %p254 = pneg %p55
        %s255 = sand.u32 %s23, 1
        %s256 = scalar_lea.sflag [#allocation11], %s255
        %s257 = sand.u32 %s71, 1
        %s258 = smul.addr %s257, 4
        %s259 = scalar_lea.vmem [#allocation10], %s258
        %p260 = pneg %p84
        %p261 = pneg %p81
        %s262 = sand.u32 %s23, 1
        %s263 = scalar_lea.sflag [#allocation11], %s262
        %s264 = sand.u32 %s97, 1
        %s265 = smul.addr %s264, 4
        %s266 = scalar_lea.vmem [#allocation12], %s265
        %p267 = pneg %p110
        %p268 = pneg %p107
        %p269 = pneg %p136
        %p270 = pneg %p133
        %s271 = sand.u32 %s123, 1
        %s272 = scalar_lea.sflag [#allocation9], %s271
        %s273 = sand.u32 %s123, 1
        %s274 = scalar_lea.vmem [#allocation13], %s273
        %s275 = smul.u32 16, %s28
        %p276 = scmp.eq.s32.totalorder %s28, 0
        // Predicated region
        $region45: #{tpu_custom_call.1} parent=31 // pred_check
          %p277 = pneg %p276
        $region46: #{tpu_custom_call.1} parent=31 // pred_check_branch
          %279 = sbr.rel (%p277) target = $region48
        $region47: #{tpu_custom_call.1} parent=31 // pred_region
          %vm280 = vcmask 253952
          %281 = vst.msk [vmem:[#allocation2] sm:$0x1] %vm280, inf
          %282 = vst.msk [vmem:[#allocation4] sm:$0x1] %vm280, inf
          %283 = vst.msk [vmem:[#allocation3] sm:$0x1] %vm280, 0.0
          %284 = vst.msk [vmem:[#allocation5] sm:$0x1] %vm280, 0.0
          %vm285 = vcmask 0
          %286 = vst.msk [vmem:[#allocation6] sm:$0x1] %vm285, 0.0
        $region48: #{tpu_custom_call.1} parent=31 // pred_fallthru
          _
        %v287 = vld [vmem:[%s225] sm:$0xff]
        %v288 = vld [vmem:[%s225 + $0x8] sm:$0xff]
        %v289 = vld [vmem:[%s225 + $0x10] sm:$0xff]
        %v290 = vld [vmem:[%s225 + $0x18] sm:$0xff]
        %v291 = vld [vmem:[%s225 + $0x20] sm:$0xff]
        %v292 = vld [vmem:[%s225 + $0x28] sm:$0xff]
        %v293 = vld [vmem:[%s225 + $0x30] sm:$0xff]
        %v294 = vld [vmem:[%s225 + $0x38] sm:$0xff]
        %v295 = vld [vmem:[%s225 + $0x40] sm:$0xff]
        %v296 = vld [vmem:[%s225 + $0x48] sm:$0xff]
        %v297 = vld [vmem:[%s225 + $0x50] sm:$0xff]
        %v298 = vld [vmem:[%s225 + $0x58] sm:$0xff]
        %v299 = vld [vmem:[%s225 + $0x60] sm:$0xff]
        %v300 = vld [vmem:[%s225 + $0x68] sm:$0xff]
        %v301 = vld [vmem:[%s225 + $0x70] sm:$0xff]
        %v302 = vld [vmem:[%s225 + $0x78] sm:$0xff]
        %v303 = vld [vmem:[%s234] sm:$0x7]
        %v304 = vld [vmem:[%s243] sm:$0x7]
        %vm305 = vcmask 23552
        %v307 = vsel %vm305, %v287, 0
        %v310 = vsel %vm305, %v288, 0
        %v313 = vsel %vm305, %v289, 0
        %v316 = vsel %vm305, %v290, 0
        %v319 = vsel %vm305, %v291, 0
        %v322 = vsel %vm305, %v292, 0
        %v325 = vsel %vm305, %v293, 0
        %v328 = vsel %vm305, %v294, 0
        %v331 = vsel %vm305, %v295, 0
        %v334 = vsel %vm305, %v296, 0
        %v337 = vsel %vm305, %v297, 0
        %v340 = vsel %vm305, %v298, 0
        %v343 = vsel %vm305, %v299, 0
        %v346 = vsel %vm305, %v300, 0
        %v349 = vsel %vm305, %v301, 0
        %v352 = vsel %vm305, %v302, 0
        %vm354 = vcmask 1042432
        %v356 = vsel %vm354, %v303, 0
        %358 = vmatprep.subr.mxu0 0.0
        %359 = vmatpush1.msra.mxu0 %v356
        %360 = vmatprep.subr.mxu0 0.0
        %361 = vmatpush1.msra.mxu0 0.0
        %362 = vmatprep.subr.mxu0 0.0
        %363 = vmatpush1.msra.mxu0 0.0
        %364 = vmatprep.subr.mxu0 0.0
        %365 = vmatpush1.msra.mxu0 0.0
        %366 = vmatprep.subr.mxu0 0.0
        %367 = vmatpush1.msra.mxu0 0.0
        %368 = vmatprep.subr.mxu0 0.0
        %369 = vmatpush1.msra.mxu0 0.0
        %370 = vmatprep.subr.mxu0 0.0
        %371 = vmatpush1.msra.mxu0 0.0
        %372 = vmatprep.subr.mxu0 0.0
        %373 = vmatpush1.msra.mxu0 0.0
        %374 = vmatprep.subr.mxu0 0.0
        %375 = vmatpush1.msra.mxu0 0.0
        %376 = vmatprep.subr.mxu0 0.0
        %377 = vmatpush1.msra.mxu0 0.0
        %378 = vmatprep.subr.mxu0 0.0
        %379 = vmatpush1.msra.mxu0 0.0
        %380 = vmatprep.subr.mxu0 0.0
        %381 = vmatpush1.msra.mxu0 0.0
        %382 = vmatprep.subr.mxu0 0.0
        %383 = vmatpush1.msra.mxu0 0.0
        %384 = vmatprep.subr.mxu0 0.0
        %385 = vmatpush1.msra.mxu0 0.0
        %386 = vmatprep.subr.mxu0 0.0
        %387 = vmatpush1.msra.mxu0 0.0
        %388 = vmatprep.subr.mxu0 0.0
        %389 = vmatpush1.msra.mxu0 0.0
        %390 = vmatprep.subr.mxu0 0.0
        %391 = vmatpush1.msra.mxu0 0.0
        %392 = vmatprep.subr.mxu0 0.0
        %393 = vmatpush1.msra.mxu0 0.0
        %394 = vmatprep.subr.mxu0 0.0
        %395 = vmatpush1.msra.mxu0 0.0
        %396 = vmatprep.subr.mxu0 0.0
        %397 = vmatpush1.msra.mxu0 0.0
        %398 = vmatprep.subr.mxu0 0.0
        %399 = vmatpush1.msra.mxu0 0.0
        %400 = vmatprep.subr.mxu0 0.0
        %401 = vmatpush1.msra.mxu0 0.0
        %402 = vmatprep.subr.mxu0 0.0
        %403 = vmatpush1.msra.mxu0 0.0
        %404 = vmatprep.subr.mxu0 0.0
        %405 = vmatpush1.msra.mxu0 0.0
        %406 = vmatprep.subr.mxu0 0.0
        %407 = vmatpush1.msra.mxu0 0.0
        %408 = vmatprep.subr.mxu0 0.0
        %409 = vmatpush1.msra.mxu0 0.0
        %410 = vmatprep.subr.mxu0 0.0
        %411 = vmatpush1.msra.mxu0 0.0
        %412 = vmatprep.subr.mxu0 0.0
        %413 = vmatpush1.msra.mxu0 0.0
        %414 = vmatprep.subr.mxu0 0.0
        %415 = vmatpush1.msra.mxu0 0.0
        %416 = vmatprep.subr.mxu0 0.0
        %417 = vmatpush1.msra.mxu0 0.0
        %418 = vmatprep.subr.mxu0 0.0
        %419 = vmatpush1.msra.mxu0 0.0
        %420 = vmatprep.subr.mxu0 0.0
        %421 = vmatpush1.msra.mxu0 0.0
        %422 = vmatprep.mubr.f32.mxu0 0.0
        %423 = vmatmul.mubr.f32.gmra.mrb[0].mxu0 %v307
        %v424 = vpop.f32.mrb[0].mxu0
        %v425 = vadd.f32 0.0, %v424
        %v426 = vpop.f32.mrb[0].mxu0
        %427 = vmatprep.mubr.f32.mxu0 0.0
        %428 = vmatmul.mubr.f32.gmra.mrb[0].mxu0 %v310
        %v429 = vpop.f32.mrb[0].mxu0
        %v430 = vadd.f32 0.0, %v429
        %v431 = vpop.f32.mrb[0].mxu0
        %432 = vmatprep.mubr.f32.mxu0 0.0
        %433 = vmatmul.mubr.f32.gmra.mrb[0].mxu0 %v313
        %v434 = vpop.f32.mrb[0].mxu0
        %v435 = vadd.f32 0.0, %v434
        %v436 = vpop.f32.mrb[0].mxu0
        %437 = vmatprep.mubr.f32.mxu0 0.0
        %438 = vmatmul.mubr.f32.gmra.mrb[0].mxu0 %v316
        %v439 = vpop.f32.mrb[0].mxu0
        %v440 = vadd.f32 0.0, %v439
        %v441 = vpop.f32.mrb[0].mxu0
        %442 = vmatprep.mubr.f32.mxu0 0.0
        %443 = vmatmul.mubr.f32.gmra.mrb[0].mxu0 %v319
        %v444 = vpop.f32.mrb[0].mxu0
        %v445 = vadd.f32 0.0, %v444
        %v446 = vpop.f32.mrb[0].mxu0
        %447 = vmatprep.mubr.f32.mxu0 0.0
        %448 = vmatmul.mubr.f32.gmra.mrb[0].mxu0 %v322
        %v449 = vpop.f32.mrb[0].mxu0
        %v450 = vadd.f32 0.0, %v449
        %v451 = vpop.f32.mrb[0].mxu0
        %452 = vmatprep.mubr.f32.mxu0 0.0
        %453 = vmatmul.mubr.f32.gmra.mrb[0].mxu0 %v325
        %v454 = vpop.f32.mrb[0].mxu0
        %v455 = vadd.f32 0.0, %v454
        %v456 = vpop.f32.mrb[0].mxu0
        %457 = vmatprep.mubr.f32.mxu0 0.0
        %458 = vmatmul.mubr.f32.gmra.mrb[0].mxu0 %v328
        %v459 = vpop.f32.mrb[0].mxu0
        %v460 = vadd.f32 0.0, %v459
        %v461 = vpop.f32.mrb[0].mxu0
        %462 = vmatprep.mubr.f32.mxu0 0.0
        %463 = vmatmul.mubr.f32.gmra.mrb[0].mxu0 %v331
        %v464 = vpop.f32.mrb[0].mxu0
        %v465 = vadd.f32 0.0, %v464
        %v466 = vpop.f32.mrb[0].mxu0
        %467 = vmatprep.mubr.f32.mxu0 0.0
        %468 = vmatmul.mubr.f32.gmra.mrb[0].mxu0 %v334
        %v469 = vpop.f32.mrb[0].mxu0
        %v470 = vadd.f32 0.0, %v469
        %v471 = vpop.f32.mrb[0].mxu0
        %472 = vmatprep.mubr.f32.mxu0 0.0
        %473 = vmatmul.mubr.f32.gmra.mrb[0].mxu0 %v337
        %v474 = vpop.f32.mrb[0].mxu0
        %v475 = vadd.f32 0.0, %v474
        %v476 = vpop.f32.mrb[0].mxu0
        %477 = vmatprep.mubr.f32.mxu0 0.0
        %478 = vmatmul.mubr.f32.gmra.mrb[0].mxu0 %v340
        %v479 = vpop.f32.mrb[0].mxu0
        %v480 = vadd.f32 0.0, %v479
        %v481 = vpop.f32.mrb[0].mxu0
        %482 = vmatprep.mubr.f32.mxu0 0.0
        %483 = vmatmul.mubr.f32.gmra.mrb[0].mxu0 %v343
        %v484 = vpop.f32.mrb[0].mxu0
        %v485 = vadd.f32 0.0, %v484
        %v486 = vpop.f32.mrb[0].mxu0
        %487 = vmatprep.mubr.f32.mxu0 0.0
        %488 = vmatmul.mubr.f32.gmra.mrb[0].mxu0 %v346
        %v489 = vpop.f32.mrb[0].mxu0
        %v490 = vadd.f32 0.0, %v489
        %v491 = vpop.f32.mrb[0].mxu0
        %492 = vmatprep.mubr.f32.mxu0 0.0
        %493 = vmatmul.mubr.f32.gmra.mrb[0].mxu0 %v349
        %v494 = vpop.f32.mrb[0].mxu0
        %v495 = vadd.f32 0.0, %v494
        %v496 = vpop.f32.mrb[0].mxu0
        %497 = vmatprep.mubr.f32.mxu0 0.0
        %498 = vmatmul.mubr.f32.gmra.mrb[0].mxu0 %v352
        %v499 = vpop.f32.mrb[0].mxu0
        %v500 = vadd.f32 0.0, %v499
        %v501 = vpop.f32.mrb[0].mxu0
        %502 = vdwg.mxu0
        %v503 = vmul.f32 %v287, %v287
        %v504 = vmul.f32 %v288, %v288
        %v505 = vmul.f32 %v289, %v289
        %v506 = vmul.f32 %v290, %v290
        %v507 = vmul.f32 %v291, %v291
        %v508 = vmul.f32 %v292, %v292
        %v509 = vmul.f32 %v293, %v293
        %v510 = vmul.f32 %v294, %v294
        %v511 = vmul.f32 %v295, %v295
        %v512 = vmul.f32 %v296, %v296
        %v513 = vmul.f32 %v297, %v297
        %v514 = vmul.f32 %v298, %v298
        %v515 = vmul.f32 %v299, %v299
        %v516 = vmul.f32 %v300, %v300
        %v517 = vmul.f32 %v301, %v301
        %v518 = vmul.f32 %v302, %v302
        %v519 = vsel %vm305, %v503, 0.0
        %520 = vadd.xlane.f32.xlu0 %v519
        %v521 = vpop.xlane.xlu0 %520
        %v522 = vsel %vm305, %v504, 0.0
        %523 = vadd.xlane.f32.xlu0 %v522
        %v524 = vpop.xlane.xlu0 %523
        %v525 = vsel %vm305, %v505, 0.0
        %526 = vadd.xlane.f32.xlu0 %v525
        %v527 = vpop.xlane.xlu0 %526
        %v528 = vsel %vm305, %v506, 0.0
        %529 = vadd.xlane.f32.xlu0 %v528
        %v530 = vpop.xlane.xlu0 %529
        %v531 = vsel %vm305, %v507, 0.0
        %532 = vadd.xlane.f32.xlu0 %v531
        %v533 = vpop.xlane.xlu0 %532
        %v534 = vsel %vm305, %v508, 0.0
        %535 = vadd.xlane.f32.xlu0 %v534
        %v536 = vpop.xlane.xlu0 %535
        %v537 = vsel %vm305, %v509, 0.0
        %538 = vadd.xlane.f32.xlu0 %v537
        %v539 = vpop.xlane.xlu0 %538
        %v540 = vsel %vm305, %v510, 0.0
        %541 = vadd.xlane.f32.xlu0 %v540
        %v542 = vpop.xlane.xlu0 %541
        %v543 = vsel %vm305, %v511, 0.0
        %544 = vadd.xlane.f32.xlu0 %v543
        %v545 = vpop.xlane.xlu0 %544
        %v546 = vsel %vm305, %v512, 0.0
        %547 = vadd.xlane.f32.xlu0 %v546
        %v548 = vpop.xlane.xlu0 %547
        %v549 = vsel %vm305, %v513, 0.0
        %550 = vadd.xlane.f32.xlu0 %v549
        %v551 = vpop.xlane.xlu0 %550
        %v552 = vsel %vm305, %v514, 0.0
        %553 = vadd.xlane.f32.xlu0 %v552
        %v554 = vpop.xlane.xlu0 %553
        %v555 = vsel %vm305, %v515, 0.0
        %556 = vadd.xlane.f32.xlu0 %v555
        %v557 = vpop.xlane.xlu0 %556
        %v558 = vsel %vm305, %v516, 0.0
        %559 = vadd.xlane.f32.xlu0 %v558
        %v560 = vpop.xlane.xlu0 %559
        %v561 = vsel %vm305, %v517, 0.0
        %562 = vadd.xlane.f32.xlu0 %v561
        %v563 = vpop.xlane.xlu0 %562
        %v564 = vsel %vm305, %v518, 0.0
        %565 = vadd.xlane.f32.xlu0 %v564
        %v566 = vpop.xlane.xlu0 %565
        %v567 = vmul.f32 %v303, %v303
        %vm568 = vcmask 256000
        %v569 = vsel %vm568, %v567, 0.0
        %v570 = vrot.slane %v569, 4
        %v571 = vadd.f32 %v569, %v570
        %v572 = vrot.slane %v571, 2
        %v573 = vadd.f32 %v571, %v572
        %v574 = vrot.slane %v573, 1
        %v575 = vadd.f32 %v573, %v574
        %v576 = vadd.f32 %v521, %v575
        %v577 = vadd.f32 %v524, %v575
        %v578 = vadd.f32 %v527, %v575
        %v579 = vadd.f32 %v530, %v575
        %v580 = vadd.f32 %v533, %v575
        %v581 = vadd.f32 %v536, %v575
        %v582 = vadd.f32 %v539, %v575
        %v583 = vadd.f32 %v542, %v575
        %v584 = vadd.f32 %v545, %v575
        %v585 = vadd.f32 %v548, %v575
        %v586 = vadd.f32 %v551, %v575
        %v587 = vadd.f32 %v554, %v575
        %v588 = vadd.f32 %v557, %v575
        %v589 = vadd.f32 %v560, %v575
        %v590 = vadd.f32 %v563, %v575
        %v591 = vadd.f32 %v566, %v575
        %v592 = vmul.f32 %v425, 2.0
        %v593 = vmul.f32 %v430, 2.0
        %v594 = vmul.f32 %v435, 2.0
        %v595 = vmul.f32 %v440, 2.0
        %v596 = vmul.f32 %v445, 2.0
        %v597 = vmul.f32 %v450, 2.0
        %v598 = vmul.f32 %v455, 2.0
        %v599 = vmul.f32 %v460, 2.0
        %v600 = vmul.f32 %v465, 2.0
        %v601 = vmul.f32 %v470, 2.0
        %v602 = vmul.f32 %v475, 2.0
        %v603 = vmul.f32 %v480, 2.0
        %v604 = vmul.f32 %v485, 2.0
        %v605 = vmul.f32 %v490, 2.0
        %v606 = vmul.f32 %v495, 2.0
        %v607 = vmul.f32 %v500, 2.0
        %v608 = vsub.f32 %v576, %v592
        %v609 = vsub.f32 %v577, %v593
        %v610 = vsub.f32 %v578, %v594
        %v611 = vsub.f32 %v579, %v595
        %v612 = vsub.f32 %v580, %v596
        %v613 = vsub.f32 %v581, %v597
        %v614 = vsub.f32 %v582, %v598
        %v615 = vsub.f32 %v583, %v599
        %v616 = vsub.f32 %v584, %v600
        %v617 = vsub.f32 %v585, %v601
        %v618 = vsub.f32 %v586, %v602
        %v619 = vsub.f32 %v587, %v603
        %v620 = vsub.f32 %v588, %v604
        %v621 = vsub.f32 %v589, %v605
        %v622 = vsub.f32 %v590, %v606
        %v623 = vsub.f32 %v591, %v607
        %v624 = vmax.f32 %v608, 0.0
        %v625 = vmax.f32 %v609, 0.0
        %v626 = vmax.f32 %v610, 0.0
        %v627 = vmax.f32 %v611, 0.0
        %v628 = vmax.f32 %v612, 0.0
        %v629 = vmax.f32 %v613, 0.0
        %v630 = vmax.f32 %v614, 0.0
        %v631 = vmax.f32 %v615, 0.0
        %v632 = vmax.f32 %v616, 0.0
        %v633 = vmax.f32 %v617, 0.0
        %v634 = vmax.f32 %v618, 0.0
        %v635 = vmax.f32 %v619, 0.0
        %v636 = vmax.f32 %v620, 0.0
        %v637 = vmax.f32 %v621, 0.0
        %v638 = vmax.f32 %v622, 0.0
        %v639 = vmax.f32 %v623, 0.0
        %640 = vrot.lane.b32.xlu0 %v287, 125
        %v641 = vpop.permute.xlu0 %640
        %642 = vrot.lane.b32.xlu0 %v288, 125
        %v643 = vpop.permute.xlu0 %642
        %644 = vrot.lane.b32.xlu0 %v289, 125
        %v645 = vpop.permute.xlu0 %644
        %646 = vrot.lane.b32.xlu0 %v290, 125
        %v647 = vpop.permute.xlu0 %646
        %648 = vrot.lane.b32.xlu0 %v291, 125
        %v649 = vpop.permute.xlu0 %648
        %650 = vrot.lane.b32.xlu0 %v292, 125
        %v651 = vpop.permute.xlu0 %650
        %652 = vrot.lane.b32.xlu0 %v293, 125
        %v653 = vpop.permute.xlu0 %652
        %654 = vrot.lane.b32.xlu0 %v294, 125
        %v655 = vpop.permute.xlu0 %654
        %656 = vrot.lane.b32.xlu0 %v295, 125
        %v657 = vpop.permute.xlu0 %656
        %658 = vrot.lane.b32.xlu0 %v296, 125
        %v659 = vpop.permute.xlu0 %658
        %660 = vrot.lane.b32.xlu0 %v297, 125
        %v661 = vpop.permute.xlu0 %660
        %662 = vrot.lane.b32.xlu0 %v298, 125
        %v663 = vpop.permute.xlu0 %662
        %664 = vrot.lane.b32.xlu0 %v299, 125
        %v665 = vpop.permute.xlu0 %664
        %666 = vrot.lane.b32.xlu0 %v300, 125
        %v667 = vpop.permute.xlu0 %666
        %668 = vrot.lane.b32.xlu0 %v301, 125
        %v669 = vpop.permute.xlu0 %668
        %670 = vrot.lane.b32.xlu0 %v302, 125
        %v671 = vpop.permute.xlu0 %670
        %v672 = vsel %vm305, %v641, 0
        %v674 = vsel %vm305, %v643, 0
        %v676 = vsel %vm305, %v645, 0
        %v678 = vsel %vm305, %v647, 0
        %v680 = vsel %vm305, %v649, 0
        %v682 = vsel %vm305, %v651, 0
        %v684 = vsel %vm305, %v653, 0
        %v686 = vsel %vm305, %v655, 0
        %v688 = vsel %vm305, %v657, 0
        %v690 = vsel %vm305, %v659, 0
        %v692 = vsel %vm305, %v661, 0
        %v694 = vsel %vm305, %v663, 0
        %v696 = vsel %vm305, %v665, 0
        %v698 = vsel %vm305, %v667, 0
        %v700 = vsel %vm305, %v669, 0
        %v702 = vsel %vm305, %v671, 0
        %v705 = vsel %vm354, %v304, 0
        %707 = vmatprep.subr.mxu0 0.0
        %708 = vmatpush1.msra.mxu0 %v705
        %709 = vmatprep.subr.mxu0 0.0
        %710 = vmatpush1.msra.mxu0 0.0
        %711 = vmatprep.subr.mxu0 0.0
        %712 = vmatpush1.msra.mxu0 0.0
        %713 = vmatprep.subr.mxu0 0.0
        %714 = vmatpush1.msra.mxu0 0.0
        %715 = vmatprep.subr.mxu0 0.0
        %716 = vmatpush1.msra.mxu0 0.0
        %717 = vmatprep.subr.mxu0 0.0
        %718 = vmatpush1.msra.mxu0 0.0
        %719 = vmatprep.subr.mxu0 0.0
        %720 = vmatpush1.msra.mxu0 0.0
        %721 = vmatprep.subr.mxu0 0.0
        %722 = vmatpush1.msra.mxu0 0.0
        %723 = vmatprep.subr.mxu0 0.0
        %724 = vmatpush1.msra.mxu0 0.0
        %725 = vmatprep.subr.mxu0 0.0
        %726 = vmatpush1.msra.mxu0 0.0
        %727 = vmatprep.subr.mxu0 0.0
        %728 = vmatpush1.msra.mxu0 0.0
        %729 = vmatprep.subr.mxu0 0.0
        %730 = vmatpush1.msra.mxu0 0.0
        %731 = vmatprep.subr.mxu0 0.0
        %732 = vmatpush1.msra.mxu0 0.0
        %733 = vmatprep.subr.mxu0 0.0
        %734 = vmatpush1.msra.mxu0 0.0
        %735 = vmatprep.subr.mxu0 0.0
        %736 = vmatpush1.msra.mxu0 0.0
        %737 = vmatprep.subr.mxu0 0.0
        %738 = vmatpush1.msra.mxu0 0.0
        %739 = vmatprep.subr.mxu0 0.0
        %740 = vmatpush1.msra.mxu0 0.0
        %741 = vmatprep.subr.mxu0 0.0
        %742 = vmatpush1.msra.mxu0 0.0
        %743 = vmatprep.subr.mxu0 0.0
        %744 = vmatpush1.msra.mxu0 0.0
        %745 = vmatprep.subr.mxu0 0.0
        %746 = vmatpush1.msra.mxu0 0.0
        %747 = vmatprep.subr.mxu0 0.0
        %748 = vmatpush1.msra.mxu0 0.0
        %749 = vmatprep.subr.mxu0 0.0
        %750 = vmatpush1.msra.mxu0 0.0
        %751 = vmatprep.subr.mxu0 0.0
        %752 = vmatpush1.msra.mxu0 0.0
        %753 = vmatprep.subr.mxu0 0.0
        %754 = vmatpush1.msra.mxu0 0.0
        %755 = vmatprep.subr.mxu0 0.0
        %756 = vmatpush1.msra.mxu0 0.0
        %757 = vmatprep.subr.mxu0 0.0
        %758 = vmatpush1.msra.mxu0 0.0
        %759 = vmatprep.subr.mxu0 0.0
        %760 = vmatpush1.msra.mxu0 0.0
        %761 = vmatprep.subr.mxu0 0.0
        %762 = vmatpush1.msra.mxu0 0.0
        %763 = vmatprep.subr.mxu0 0.0
        %764 = vmatpush1.msra.mxu0 0.0
        %765 = vmatprep.subr.mxu0 0.0
        %766 = vmatpush1.msra.mxu0 0.0
        %767 = vmatprep.subr.mxu0 0.0
        %768 = vmatpush1.msra.mxu0 0.0
        %769 = vmatprep.subr.mxu0 0.0
        %770 = vmatpush1.msra.mxu0 0.0
        %771 = vmatprep.mubr.f32.mxu0 0.0
        %772 = vmatmul.mubr.f32.gmra.mrb[0].mxu0 %v672
        %v773 = vpop.f32.mrb[0].mxu0
        %v774 = vadd.f32 0.0, %v773
        %v775 = vpop.f32.mrb[0].mxu0
        %776 = vmatprep.mubr.f32.mxu0 0.0
        %777 = vmatmul.mubr.f32.gmra.mrb[0].mxu0 %v674
        %v778 = vpop.f32.mrb[0].mxu0
        %v779 = vadd.f32 0.0, %v778
        %v780 = vpop.f32.mrb[0].mxu0
        %781 = vmatprep.mubr.f32.mxu0 0.0
        %782 = vmatmul.mubr.f32.gmra.mrb[0].mxu0 %v676
        %v783 = vpop.f32.mrb[0].mxu0
        %v784 = vadd.f32 0.0, %v783
        %v785 = vpop.f32.mrb[0].mxu0
        %786 = vmatprep.mubr.f32.mxu0 0.0
        %787 = vmatmul.mubr.f32.gmra.mrb[0].mxu0 %v678
        %v788 = vpop.f32.mrb[0].mxu0
        %v789 = vadd.f32 0.0, %v788
        %v790 = vpop.f32.mrb[0].mxu0
        %791 = vmatprep.mubr.f32.mxu0 0.0
        %792 = vmatmul.mubr.f32.gmra.mrb[0].mxu0 %v680
        %v793 = vpop.f32.mrb[0].mxu0
        %v794 = vadd.f32 0.0, %v793
        %v795 = vpop.f32.mrb[0].mxu0
        %796 = vmatprep.mubr.f32.mxu0 0.0
        %797 = vmatmul.mubr.f32.gmra.mrb[0].mxu0 %v682
        %v798 = vpop.f32.mrb[0].mxu0
        %v799 = vadd.f32 0.0, %v798
        %v800 = vpop.f32.mrb[0].mxu0
        %801 = vmatprep.mubr.f32.mxu0 0.0
        %802 = vmatmul.mubr.f32.gmra.mrb[0].mxu0 %v684
        %v803 = vpop.f32.mrb[0].mxu0
        %v804 = vadd.f32 0.0, %v803
        %v805 = vpop.f32.mrb[0].mxu0
        %806 = vmatprep.mubr.f32.mxu0 0.0
        %807 = vmatmul.mubr.f32.gmra.mrb[0].mxu0 %v686
        %v808 = vpop.f32.mrb[0].mxu0
        %v809 = vadd.f32 0.0, %v808
        %v810 = vpop.f32.mrb[0].mxu0
        %811 = vmatprep.mubr.f32.mxu0 0.0
        %812 = vmatmul.mubr.f32.gmra.mrb[0].mxu0 %v688
        %v813 = vpop.f32.mrb[0].mxu0
        %v814 = vadd.f32 0.0, %v813
        %v815 = vpop.f32.mrb[0].mxu0
        %816 = vmatprep.mubr.f32.mxu0 0.0
        %817 = vmatmul.mubr.f32.gmra.mrb[0].mxu0 %v690
        %v818 = vpop.f32.mrb[0].mxu0
        %v819 = vadd.f32 0.0, %v818
        %v820 = vpop.f32.mrb[0].mxu0
        %821 = vmatprep.mubr.f32.mxu0 0.0
        %822 = vmatmul.mubr.f32.gmra.mrb[0].mxu0 %v692
        %v823 = vpop.f32.mrb[0].mxu0
        %v824 = vadd.f32 0.0, %v823
        %v825 = vpop.f32.mrb[0].mxu0
        %826 = vmatprep.mubr.f32.mxu0 0.0
        %827 = vmatmul.mubr.f32.gmra.mrb[0].mxu0 %v694
        %v828 = vpop.f32.mrb[0].mxu0
        %v829 = vadd.f32 0.0, %v828
        %v830 = vpop.f32.mrb[0].mxu0
        %831 = vmatprep.mubr.f32.mxu0 0.0
        %832 = vmatmul.mubr.f32.gmra.mrb[0].mxu0 %v696
        %v833 = vpop.f32.mrb[0].mxu0
        %v834 = vadd.f32 0.0, %v833
        %v835 = vpop.f32.mrb[0].mxu0
        %836 = vmatprep.mubr.f32.mxu0 0.0
        %837 = vmatmul.mubr.f32.gmra.mrb[0].mxu0 %v698
        %v838 = vpop.f32.mrb[0].mxu0
        %v839 = vadd.f32 0.0, %v838
        %v840 = vpop.f32.mrb[0].mxu0
        %841 = vmatprep.mubr.f32.mxu0 0.0
        %842 = vmatmul.mubr.f32.gmra.mrb[0].mxu0 %v700
        %v843 = vpop.f32.mrb[0].mxu0
        %v844 = vadd.f32 0.0, %v843
        %v845 = vpop.f32.mrb[0].mxu0
        %846 = vmatprep.mubr.f32.mxu0 0.0
        %847 = vmatmul.mubr.f32.gmra.mrb[0].mxu0 %v702
        %v848 = vpop.f32.mrb[0].mxu0
        %v849 = vadd.f32 0.0, %v848
        %v850 = vpop.f32.mrb[0].mxu0
        %851 = vdwg.mxu0
        %v852 = vand.u32 2147483647, %v774
        %v853 = vand.u32 2147483647, %v779
        %v854 = vand.u32 2147483647, %v784
        %v855 = vand.u32 2147483647, %v789
        %v856 = vand.u32 2147483647, %v794
        %v857 = vand.u32 2147483647, %v799
        %v858 = vand.u32 2147483647, %v804
        %v859 = vand.u32 2147483647, %v809
        %v860 = vand.u32 2147483647, %v814
        %v861 = vand.u32 2147483647, %v819
        %v862 = vand.u32 2147483647, %v824
        %v863 = vand.u32 2147483647, %v829
        %v864 = vand.u32 2147483647, %v834
        %v865 = vand.u32 2147483647, %v839
        %v866 = vand.u32 2147483647, %v844
        %v867 = vand.u32 2147483647, %v849
        %v868 = vld [vmem:[#allocation6] sm:$0x1]
        %vm869 = vcmask 261120
        %v870 = vsel %vm869, %v624, inf
        %871 = vmin.xlane.f32.xlu0 %v870
        %v872 = vpop.xlane.xlu0 %871
        %v873 = vsel %vm869, %v625, inf
        %874 = vmin.xlane.f32.xlu0 %v873
        %v875 = vpop.xlane.xlu0 %874
        %v876 = vsel %vm869, %v626, inf
        %877 = vmin.xlane.f32.xlu0 %v876
        %v878 = vpop.xlane.xlu0 %877
        %v879 = vsel %vm869, %v627, inf
        %880 = vmin.xlane.f32.xlu0 %v879
        %v881 = vpop.xlane.xlu0 %880
        %v882 = vsel %vm869, %v628, inf
        %883 = vmin.xlane.f32.xlu0 %v882
        %v884 = vpop.xlane.xlu0 %883
        %v885 = vsel %vm869, %v629, inf
        %886 = vmin.xlane.f32.xlu0 %v885
        %v887 = vpop.xlane.xlu0 %886
        %v888 = vsel %vm869, %v630, inf
        %889 = vmin.xlane.f32.xlu0 %v888
        %v890 = vpop.xlane.xlu0 %889
        %v891 = vsel %vm869, %v631, inf
        %892 = vmin.xlane.f32.xlu0 %v891
        %v893 = vpop.xlane.xlu0 %892
        %v894 = vsel %vm869, %v632, inf
        %895 = vmin.xlane.f32.xlu0 %v894
        %v896 = vpop.xlane.xlu0 %895
        %v897 = vsel %vm869, %v633, inf
        %898 = vmin.xlane.f32.xlu0 %v897
        %v899 = vpop.xlane.xlu0 %898
        %v900 = vsel %vm869, %v634, inf
        %901 = vmin.xlane.f32.xlu0 %v900
        %v902 = vpop.xlane.xlu0 %901
        %v903 = vsel %vm869, %v635, inf
        %904 = vmin.xlane.f32.xlu0 %v903
        %v905 = vpop.xlane.xlu0 %904
        %v906 = vsel %vm869, %v636, inf
        %907 = vmin.xlane.f32.xlu0 %v906
        %v908 = vpop.xlane.xlu0 %907
        %v909 = vsel %vm869, %v637, inf
        %910 = vmin.xlane.f32.xlu0 %v909
        %v911 = vpop.xlane.xlu0 %910
        %v912 = vsel %vm869, %v638, inf
        %913 = vmin.xlane.f32.xlu0 %v912
        %v914 = vpop.xlane.xlu0 %913
        %v915 = vsel %vm869, %v639, inf
        %916 = vmin.xlane.f32.xlu0 %v915
        %v917 = vpop.xlane.xlu0 %916
        %v918 = vrsqrt.pop %v872
        %v919 = vmul.f32 %v872, %v918
        %vm920 = vcmp.eq.f32.partialorder %v872, inf
        %v921 = vsel %vm920, %v872, %v919
        %vm922 = vcmp.eq.f32.partialorder %v872, 0.0
        %v923 = vand.u32 %v872, 2147483648
        %v924 = vsel %vm922, %v923, %v921
        %v925 = vrsqrt.pop %v875
        %v926 = vmul.f32 %v875, %v925
        %vm927 = vcmp.eq.f32.partialorder %v875, inf
        %v928 = vsel %vm927, %v875, %v926
        %vm929 = vcmp.eq.f32.partialorder %v875, 0.0
        %v930 = vand.u32 %v875, 2147483648
        %v931 = vsel %vm929, %v930, %v928
        %v932 = vrsqrt.pop %v878
        %v933 = vmul.f32 %v878, %v932
        %vm934 = vcmp.eq.f32.partialorder %v878, inf
        %v935 = vsel %vm934, %v878, %v933
        %vm936 = vcmp.eq.f32.partialorder %v878, 0.0
        %v937 = vand.u32 %v878, 2147483648
        %v938 = vsel %vm936, %v937, %v935
        %v939 = vrsqrt.pop %v881
        %v940 = vmul.f32 %v881, %v939
        %vm941 = vcmp.eq.f32.partialorder %v881, inf
        %v942 = vsel %vm941, %v881, %v940
        %vm943 = vcmp.eq.f32.partialorder %v881, 0.0
        %v944 = vand.u32 %v881, 2147483648
        %v945 = vsel %vm943, %v944, %v942
        %v946 = vrsqrt.pop %v884
        %v947 = vmul.f32 %v884, %v946
        %vm948 = vcmp.eq.f32.partialorder %v884, inf
        %v949 = vsel %vm948, %v884, %v947
        %vm950 = vcmp.eq.f32.partialorder %v884, 0.0
        %v951 = vand.u32 %v884, 2147483648
        %v952 = vsel %vm950, %v951, %v949
        %v953 = vrsqrt.pop %v887
        %v954 = vmul.f32 %v887, %v953
        %vm955 = vcmp.eq.f32.partialorder %v887, inf
        %v956 = vsel %vm955, %v887, %v954
        %vm957 = vcmp.eq.f32.partialorder %v887, 0.0
        %v958 = vand.u32 %v887, 2147483648
        %v959 = vsel %vm957, %v958, %v956
        %v960 = vrsqrt.pop %v890
        %v961 = vmul.f32 %v890, %v960
        %vm962 = vcmp.eq.f32.partialorder %v890, inf
        %v963 = vsel %vm962, %v890, %v961
        %vm964 = vcmp.eq.f32.partialorder %v890, 0.0
        %v965 = vand.u32 %v890, 2147483648
        %v966 = vsel %vm964, %v965, %v963
        %v967 = vrsqrt.pop %v893
        %v968 = vmul.f32 %v893, %v967
        %vm969 = vcmp.eq.f32.partialorder %v893, inf
        %v970 = vsel %vm969, %v893, %v968
        %vm971 = vcmp.eq.f32.partialorder %v893, 0.0
        %v972 = vand.u32 %v893, 2147483648
        %v973 = vsel %vm971, %v972, %v970
        %v974 = vrsqrt.pop %v896
        %v975 = vmul.f32 %v896, %v974
        %vm976 = vcmp.eq.f32.partialorder %v896, inf
        %v977 = vsel %vm976, %v896, %v975
        %vm978 = vcmp.eq.f32.partialorder %v896, 0.0
        %v979 = vand.u32 %v896, 2147483648
        %v980 = vsel %vm978, %v979, %v977
        %v981 = vrsqrt.pop %v899
        %v982 = vmul.f32 %v899, %v981
        %vm983 = vcmp.eq.f32.partialorder %v899, inf
        %v984 = vsel %vm983, %v899, %v982
        %vm985 = vcmp.eq.f32.partialorder %v899, 0.0
        %v986 = vand.u32 %v899, 2147483648
        %v987 = vsel %vm985, %v986, %v984
        %v988 = vrsqrt.pop %v902
        %v989 = vmul.f32 %v902, %v988
        %vm990 = vcmp.eq.f32.partialorder %v902, inf
        %v991 = vsel %vm990, %v902, %v989
        %vm992 = vcmp.eq.f32.partialorder %v902, 0.0
        %v993 = vand.u32 %v902, 2147483648
        %v994 = vsel %vm992, %v993, %v991
        %v995 = vrsqrt.pop %v905
        %v996 = vmul.f32 %v905, %v995
        %vm997 = vcmp.eq.f32.partialorder %v905, inf
        %v998 = vsel %vm997, %v905, %v996
        %vm999 = vcmp.eq.f32.partialorder %v905, 0.0
        %v1000 = vand.u32 %v905, 2147483648
        %v1001 = vsel %vm999, %v1000, %v998
        %v1002 = vrsqrt.pop %v908
        %v1003 = vmul.f32 %v908, %v1002
        %vm1004 = vcmp.eq.f32.partialorder %v908, inf
        %v1005 = vsel %vm1004, %v908, %v1003
        %vm1006 = vcmp.eq.f32.partialorder %v908, 0.0
        %v1007 = vand.u32 %v908, 2147483648
        %v1008 = vsel %vm1006, %v1007, %v1005
        %v1009 = vrsqrt.pop %v911
        %v1010 = vmul.f32 %v911, %v1009
        %vm1011 = vcmp.eq.f32.partialorder %v911, inf
        %v1012 = vsel %vm1011, %v911, %v1010
        %vm1013 = vcmp.eq.f32.partialorder %v911, 0.0
        %v1014 = vand.u32 %v911, 2147483648
        %v1015 = vsel %vm1013, %v1014, %v1012
        %v1016 = vrsqrt.pop %v914
        %v1017 = vmul.f32 %v914, %v1016
        %vm1018 = vcmp.eq.f32.partialorder %v914, inf
        %v1019 = vsel %vm1018, %v914, %v1017
        %vm1020 = vcmp.eq.f32.partialorder %v914, 0.0
        %v1021 = vand.u32 %v914, 2147483648
        %v1022 = vsel %vm1020, %v1021, %v1019
        %v1023 = vrsqrt.pop %v917
        %v1024 = vmul.f32 %v917, %v1023
        %vm1025 = vcmp.eq.f32.partialorder %v917, inf
        %v1026 = vsel %vm1025, %v917, %v1024
        %vm1027 = vcmp.eq.f32.partialorder %v917, 0.0
        %v1028 = vand.u32 %v917, 2147483648
        %v1029 = vsel %vm1027, %v1028, %v1026
        %vm1030 = vcmask 7168
        %v1031 = vsel %vm1030, %v924, 0.0
        %v1032 = vsel %vm1030, %v931, 0.0
        %v1033 = vadd.f32 %v1031, %v1032
        %v1034 = vsel %vm1030, %v938, 0.0
        %v1035 = vadd.f32 %v1033, %v1034
        %v1036 = vsel %vm1030, %v945, 0.0
        %v1037 = vadd.f32 %v1035, %v1036
        %v1038 = vsel %vm1030, %v952, 0.0
        %v1039 = vadd.f32 %v1037, %v1038
        %v1040 = vsel %vm1030, %v959, 0.0
        %v1041 = vadd.f32 %v1039, %v1040
        %v1042 = vsel %vm1030, %v966, 0.0
        %v1043 = vadd.f32 %v1041, %v1042
        %v1044 = vsel %vm1030, %v973, 0.0
        %v1045 = vadd.f32 %v1043, %v1044
        %v1046 = vsel %vm1030, %v980, 0.0
        %v1047 = vadd.f32 %v1045, %v1046
        %v1048 = vsel %vm1030, %v987, 0.0
        %v1049 = vadd.f32 %v1047, %v1048
        %v1050 = vsel %vm1030, %v994, 0.0
        %v1051 = vadd.f32 %v1049, %v1050
        %v1052 = vsel %vm1030, %v1001, 0.0
        %v1053 = vadd.f32 %v1051, %v1052
        %v1054 = vsel %vm1030, %v1008, 0.0
        %v1055 = vadd.f32 %v1053, %v1054
        %v1056 = vsel %vm1030, %v1015, 0.0
        %v1057 = vadd.f32 %v1055, %v1056
        %v1058 = vsel %vm1030, %v1022, 0.0
        %v1059 = vadd.f32 %v1057, %v1058
        %v1060 = vsel %vm1030, %v1029, 0.0
        %v1061 = vadd.f32 %v1059, %v1060
        %1062 = vadd.xlane.f32.xlu0 %v1061
        %v1063 = vpop.xlane.xlu0 %1062
        %v1064 = vrot.slane %v1063, 4
        %v1065 = vadd.f32 %v1063, %v1064
        %v1066 = vrot.slane %v1065, 2
        %v1067 = vadd.f32 %v1065, %v1066
        %v1068 = vrot.slane %v1067, 1
        %v1069 = vadd.f32 %v1067, %v1068
        %s1070 = vtos %v1069
        %v1071 = vstv %s1070
        %v1072 = vadd.f32 %v868, %v1071
        %vm1073 = vcmask 0
        %1074 = vst.msk [vmem:[#allocation6] sm:$0x1] %vm1073, %v1072
        %v1075 = vlaneseq
        %v1076 = vshrl.u32 %v1075, 7
        %v1077 = vadd.s32 %v1076, 8
        %v1078 = vadd.s32 %v1076, 16
        %v1079 = vadd.s32 %v1076, 24
        %v1080 = vadd.s32 %v1076, 32
        %v1081 = vadd.s32 %v1076, 40
        %v1082 = vadd.s32 %v1076, 48
        %v1083 = vadd.s32 %v1076, 56
        %v1084 = vadd.s32 %v1076, 64
        %v1085 = vadd.s32 %v1076, 72
        %v1086 = vadd.s32 %v1076, 80
        %v1087 = vadd.s32 %v1076, 88
        %v1088 = vadd.s32 %v1076, 96
        %v1089 = vadd.s32 %v1076, 104
        %v1090 = vadd.s32 %v1076, 112
        %v1091 = vadd.s32 %v1076, 120
        %s1092 = smul.u32 %s28, 128
        %v1093 = vstv %s1092
        %v1094 = vadd.s32 %v1076, %v1093
        %v1095 = vadd.s32 %v1077, %v1093
        %v1096 = vadd.s32 %v1078, %v1093
        %v1097 = vadd.s32 %v1079, %v1093
        %v1098 = vadd.s32 %v1080, %v1093
        %v1099 = vadd.s32 %v1081, %v1093
        %v1100 = vadd.s32 %v1082, %v1093
        %v1101 = vadd.s32 %v1083, %v1093
        %v1102 = vadd.s32 %v1084, %v1093
        %v1103 = vadd.s32 %v1085, %v1093
        %v1104 = vadd.s32 %v1086, %v1093
        %v1105 = vadd.s32 %v1087, %v1093
        %v1106 = vadd.s32 %v1088, %v1093
        %v1107 = vadd.s32 %v1089, %v1093
        %v1108 = vadd.s32 %v1090, %v1093
        %v1109 = vadd.s32 %v1091, %v1093
        %v1110 = vmin.f32 %v870, %v882
        %v1111 = vmin.f32 %v873, %v885
        %v1112 = vmin.f32 %v876, %v888
        %v1113 = vmin.f32 %v879, %v891
        %v1114 = vmin.f32 %v1110, %v894
        %v1115 = vmin.f32 %v1111, %v897
        %v1116 = vmin.f32 %v1112, %v900
        %v1117 = vmin.f32 %v1113, %v903
        %v1118 = vmin.f32 %v1114, %v906
        %v1119 = vmin.f32 %v1115, %v909
        %v1120 = vmin.f32 %v1116, %v912
        %v1121 = vmin.f32 %v1117, %v915
        %v1122 = vmin.f32 %v1118, %v1119
        %v1123 = vmin.f32 %v1120, %v1121
        %v1124 = vmin.f32 %v1122, %v1123
        %v1125 = vrot.slane %v1124, 4
        %v1126 = vmin.f32 %v1124, %v1125
        %v1127 = vrot.slane %v1126, 2
        %v1128 = vmin.f32 %v1126, %v1127
        %v1129 = vrot.slane %v1128, 1
        %v1130 = vmin.f32 %v1128, %v1129
        %vm1131 = vcmp.eq.f32.partialorder %v624, %v1130
        %vm1132 = vcmp.eq.f32.partialorder %v625, %v1130
        %vm1133 = vcmp.eq.f32.partialorder %v626, %v1130
        %vm1134 = vcmp.eq.f32.partialorder %v627, %v1130
        %vm1135 = vcmp.eq.f32.partialorder %v628, %v1130
        %vm1136 = vcmp.eq.f32.partialorder %v629, %v1130
        %vm1137 = vcmp.eq.f32.partialorder %v630, %v1130
        %vm1138 = vcmp.eq.f32.partialorder %v631, %v1130
        %vm1139 = vcmp.eq.f32.partialorder %v632, %v1130
        %vm1140 = vcmp.eq.f32.partialorder %v633, %v1130
        %vm1141 = vcmp.eq.f32.partialorder %v634, %v1130
        %vm1142 = vcmp.eq.f32.partialorder %v635, %v1130
        %vm1143 = vcmp.eq.f32.partialorder %v636, %v1130
        %vm1144 = vcmp.eq.f32.partialorder %v637, %v1130
        %vm1145 = vcmp.eq.f32.partialorder %v638, %v1130
        %vm1146 = vcmp.eq.f32.partialorder %v639, %v1130
        %v1147 = vsel %vm1131, %v1094, 2147483647
        %v1148 = vsel %vm1132, %v1095, 2147483647
        %v1149 = vsel %vm1133, %v1096, 2147483647
        %v1150 = vsel %vm1134, %v1097, 2147483647
        %v1151 = vsel %vm1135, %v1098, 2147483647
        %v1152 = vsel %vm1136, %v1099, 2147483647
        %v1153 = vsel %vm1137, %v1100, 2147483647
        %v1154 = vsel %vm1138, %v1101, 2147483647
        %v1155 = vsel %vm1139, %v1102, 2147483647
        %v1156 = vsel %vm1140, %v1103, 2147483647
        %v1157 = vsel %vm1141, %v1104, 2147483647
        %v1158 = vsel %vm1142, %v1105, 2147483647
        %v1159 = vsel %vm1143, %v1106, 2147483647
        %v1160 = vsel %vm1144, %v1107, 2147483647
        %v1161 = vsel %vm1145, %v1108, 2147483647
        %v1162 = vsel %vm1146, %v1109, 2147483647
        %v1163 = vsel %vm869, %v1147, 2147483647
        %v1164 = vsel %vm869, %v1148, 2147483647
        %v1165 = vsel %vm869, %v1149, 2147483647
        %v1166 = vsel %vm869, %v1150, 2147483647
        %v1167 = vsel %vm869, %v1151, 2147483647
        %vm1168 = vcmp.lt.s32.totalorder %v1163, %v1167
        %v1169 = vsel %vm1168, %v1163, %v1167
        %v1170 = vsel %vm869, %v1152, 2147483647
        %vm1171 = vcmp.lt.s32.totalorder %v1164, %v1170
        %v1172 = vsel %vm1171, %v1164, %v1170
        %v1173 = vsel %vm869, %v1153, 2147483647
        %vm1174 = vcmp.lt.s32.totalorder %v1165, %v1173
        %v1175 = vsel %vm1174, %v1165, %v1173
        %v1176 = vsel %vm869, %v1154, 2147483647
        %vm1177 = vcmp.lt.s32.totalorder %v1166, %v1176
        %v1178 = vsel %vm1177, %v1166, %v1176
        %v1179 = vsel %vm869, %v1155, 2147483647
        %vm1180 = vcmp.lt.s32.totalorder %v1169, %v1179
        %v1181 = vsel %vm1180, %v1169, %v1179
        %v1182 = vsel %vm869, %v1156, 2147483647
        %vm1183 = vcmp.lt.s32.totalorder %v1172, %v1182
        %v1184 = vsel %vm1183, %v1172, %v1182
        %v1185 = vsel %vm869, %v1157, 2147483647
        %vm1186 = vcmp.lt.s32.totalorder %v1175, %v1185
        %v1187 = vsel %vm1186, %v1175, %v1185
        %v1188 = vsel %vm869, %v1158, 2147483647
        %vm1189 = vcmp.lt.s32.totalorder %v1178, %v1188
        %v1190 = vsel %vm1189, %v1178, %v1188
        %v1191 = vsel %vm869, %v1159, 2147483647
        %vm1192 = vcmp.lt.s32.totalorder %v1181, %v1191
        %v1193 = vsel %vm1192, %v1181, %v1191
        %v1194 = vsel %vm869, %v1160, 2147483647
        %vm1195 = vcmp.lt.s32.totalorder %v1184, %v1194
        %v1196 = vsel %vm1195, %v1184, %v1194
        %v1197 = vsel %vm869, %v1161, 2147483647
        %vm1198 = vcmp.lt.s32.totalorder %v1187, %v1197
        %v1199 = vsel %vm1198, %v1187, %v1197
        %v1200 = vsel %vm869, %v1162, 2147483647
        %vm1201 = vcmp.lt.s32.totalorder %v1190, %v1200
        %v1202 = vsel %vm1201, %v1190, %v1200
        %vm1203 = vcmp.lt.s32.totalorder %v1193, %v1196
        %v1204 = vsel %vm1203, %v1193, %v1196
        %vm1205 = vcmp.lt.s32.totalorder %v1199, %v1202
        %v1206 = vsel %vm1205, %v1199, %v1202
        %vm1207 = vcmp.lt.s32.totalorder %v1204, %v1206
        %v1208 = vsel %vm1207, %v1204, %v1206
        %v1209 = vrot.slane %v1208, 4
        %vm1210 = vcmp.lt.s32.totalorder %v1208, %v1209
        %v1211 = vsel %vm1210, %v1208, %v1209
        %v1212 = vrot.slane %v1211, 2
        %vm1213 = vcmp.lt.s32.totalorder %v1211, %v1212
        %v1214 = vsel %vm1213, %v1211, %v1212
        %v1215 = vrot.slane %v1214, 1
        %vm1216 = vcmp.lt.s32.totalorder %v1214, %v1215
        %v1217 = vsel %vm1216, %v1214, %v1215
        %vm1218 = vcmp.eq.s32.totalorder %v1094, %v1217
        %vm1219 = vcmp.eq.s32.totalorder %v1095, %v1217
        %vm1220 = vcmp.eq.s32.totalorder %v1096, %v1217
        %vm1221 = vcmp.eq.s32.totalorder %v1097, %v1217
        %vm1222 = vcmp.eq.s32.totalorder %v1098, %v1217
        %vm1223 = vcmp.eq.s32.totalorder %v1099, %v1217
        %vm1224 = vcmp.eq.s32.totalorder %v1100, %v1217
        %vm1225 = vcmp.eq.s32.totalorder %v1101, %v1217
        %vm1226 = vcmp.eq.s32.totalorder %v1102, %v1217
        %vm1227 = vcmp.eq.s32.totalorder %v1103, %v1217
        %vm1228 = vcmp.eq.s32.totalorder %v1104, %v1217
        %vm1229 = vcmp.eq.s32.totalorder %v1105, %v1217
        %vm1230 = vcmp.eq.s32.totalorder %v1106, %v1217
        %vm1231 = vcmp.eq.s32.totalorder %v1107, %v1217
        %vm1232 = vcmp.eq.s32.totalorder %v1108, %v1217
        %vm1233 = vcmp.eq.s32.totalorder %v1109, %v1217
        %v1234 = vsel %vm1218, %v852, 0.0
        %v1235 = vsel %vm1219, %v853, 0.0
        %v1236 = vsel %vm1220, %v854, 0.0
        %v1237 = vsel %vm1221, %v855, 0.0
        %v1238 = vsel %vm1222, %v856, 0.0
        %v1239 = vsel %vm1223, %v857, 0.0
        %v1240 = vsel %vm1224, %v858, 0.0
        %v1241 = vsel %vm1225, %v859, 0.0
        %v1242 = vsel %vm1226, %v860, 0.0
        %v1243 = vsel %vm1227, %v861, 0.0
        %v1244 = vsel %vm1228, %v862, 0.0
        %v1245 = vsel %vm1229, %v863, 0.0
        %v1246 = vsel %vm1230, %v864, 0.0
        %v1247 = vsel %vm1231, %v865, 0.0
        %v1248 = vsel %vm1232, %v866, 0.0
        %v1249 = vsel %vm1233, %v867, 0.0
        %v1250 = vsel %vm869, %v1234, 0.0
        %v1251 = vsel %vm869, %v1235, 0.0
        %v1252 = vadd.f32 %v1250, %v1251
        %v1253 = vsel %vm869, %v1236, 0.0
        %v1254 = vadd.f32 %v1252, %v1253
        %v1255 = vsel %vm869, %v1237, 0.0
        %v1256 = vadd.f32 %v1254, %v1255
        %v1257 = vsel %vm869, %v1238, 0.0
        %v1258 = vadd.f32 %v1256, %v1257
        %v1259 = vsel %vm869, %v1239, 0.0
        %v1260 = vadd.f32 %v1258, %v1259
        %v1261 = vsel %vm869, %v1240, 0.0
        %v1262 = vadd.f32 %v1260, %v1261
        %v1263 = vsel %vm869, %v1241, 0.0
        %v1264 = vadd.f32 %v1262, %v1263
        %v1265 = vsel %vm869, %v1242, 0.0
        %v1266 = vadd.f32 %v1264, %v1265
        %v1267 = vsel %vm869, %v1243, 0.0
        %v1268 = vadd.f32 %v1266, %v1267
        %v1269 = vsel %vm869, %v1244, 0.0
        %v1270 = vadd.f32 %v1268, %v1269
        %v1271 = vsel %vm869, %v1245, 0.0
        %v1272 = vadd.f32 %v1270, %v1271
        %v1273 = vsel %vm869, %v1246, 0.0
        %v1274 = vadd.f32 %v1272, %v1273
        %v1275 = vsel %vm869, %v1247, 0.0
        %v1276 = vadd.f32 %v1274, %v1275
        %v1277 = vsel %vm869, %v1248, 0.0
        %v1278 = vadd.f32 %v1276, %v1277
        %v1279 = vsel %vm869, %v1249, 0.0
        %v1280 = vadd.f32 %v1278, %v1279
        %v1281 = vrot.slane %v1280, 4
        %v1282 = vadd.f32 %v1280, %v1281
        %v1283 = vrot.slane %v1282, 2
        %v1284 = vadd.f32 %v1282, %v1283
        %v1285 = vrot.slane %v1284, 1
        %v1286 = vadd.f32 %v1284, %v1285
        %v1287 = vsel %vm1218, inf, %v624
        %v1288 = vsel %vm1219, inf, %v625
        %v1289 = vsel %vm1220, inf, %v626
        %v1290 = vsel %vm1221, inf, %v627
        %v1291 = vsel %vm1222, inf, %v628
        %v1292 = vsel %vm1223, inf, %v629
        %v1293 = vsel %vm1224, inf, %v630
        %v1294 = vsel %vm1225, inf, %v631
        %v1295 = vsel %vm1226, inf, %v632
        %v1296 = vsel %vm1227, inf, %v633
        %v1297 = vsel %vm1228, inf, %v634
        %v1298 = vsel %vm1229, inf, %v635
        %v1299 = vsel %vm1230, inf, %v636
        %v1300 = vsel %vm1231, inf, %v637
        %v1301 = vsel %vm1232, inf, %v638
        %v1302 = vsel %vm1233, inf, %v639
        %v1303 = vsel %vm869, %v1287, inf
        %v1304 = vsel %vm869, %v1288, inf
        %v1305 = vsel %vm869, %v1289, inf
        %v1306 = vsel %vm869, %v1290, inf
        %v1307 = vsel %vm869, %v1291, inf
        %v1308 = vmin.f32 %v1303, %v1307
        %v1309 = vsel %vm869, %v1292, inf
        %v1310 = vmin.f32 %v1304, %v1309
        %v1311 = vsel %vm869, %v1293, inf
        %v1312 = vmin.f32 %v1305, %v1311
        %v1313 = vsel %vm869, %v1294, inf
        %v1314 = vmin.f32 %v1306, %v1313
        %v1315 = vsel %vm869, %v1295, inf
        %v1316 = vmin.f32 %v1308, %v1315
        %v1317 = vsel %vm869, %v1296, inf
        %v1318 = vmin.f32 %v1310, %v1317
        %v1319 = vsel %vm869, %v1297, inf
        %v1320 = vmin.f32 %v1312, %v1319
        %v1321 = vsel %vm869, %v1298, inf
        %v1322 = vmin.f32 %v1314, %v1321
        %v1323 = vsel %vm869, %v1299, inf
        %v1324 = vmin.f32 %v1316, %v1323
        %v1325 = vsel %vm869, %v1300, inf
        %v1326 = vmin.f32 %v1318, %v1325
        %v1327 = vsel %vm869, %v1301, inf
        %v1328 = vmin.f32 %v1320, %v1327
        %v1329 = vsel %vm869, %v1302, inf
        %v1330 = vmin.f32 %v1322, %v1329
        %v1331 = vmin.f32 %v1324, %v1326
        %v1332 = vmin.f32 %v1328, %v1330
        %v1333 = vmin.f32 %v1331, %v1332
        %v1334 = vrot.slane %v1333, 4
        %v1335 = vmin.f32 %v1333, %v1334
        %v1336 = vrot.slane %v1335, 2
        %v1337 = vmin.f32 %v1335, %v1336
        %v1338 = vrot.slane %v1337, 1
        %v1339 = vmin.f32 %v1337, %v1338
        %vm1340 = vcmp.eq.f32.partialorder %v1287, %v1339
        %vm1341 = vcmp.eq.f32.partialorder %v1288, %v1339
        %vm1342 = vcmp.eq.f32.partialorder %v1289, %v1339
        %vm1343 = vcmp.eq.f32.partialorder %v1290, %v1339
        %vm1344 = vcmp.eq.f32.partialorder %v1291, %v1339
        %vm1345 = vcmp.eq.f32.partialorder %v1292, %v1339
        %vm1346 = vcmp.eq.f32.partialorder %v1293, %v1339
        %vm1347 = vcmp.eq.f32.partialorder %v1294, %v1339
        %vm1348 = vcmp.eq.f32.partialorder %v1295, %v1339
        %vm1349 = vcmp.eq.f32.partialorder %v1296, %v1339
        %vm1350 = vcmp.eq.f32.partialorder %v1297, %v1339
        %vm1351 = vcmp.eq.f32.partialorder %v1298, %v1339
        %vm1352 = vcmp.eq.f32.partialorder %v1299, %v1339
        %vm1353 = vcmp.eq.f32.partialorder %v1300, %v1339
        %vm1354 = vcmp.eq.f32.partialorder %v1301, %v1339
        %vm1355 = vcmp.eq.f32.partialorder %v1302, %v1339
        %v1356 = vsel %vm1340, %v1094, 2147483647
        %v1357 = vsel %vm1341, %v1095, 2147483647
        %v1358 = vsel %vm1342, %v1096, 2147483647
        %v1359 = vsel %vm1343, %v1097, 2147483647
        %v1360 = vsel %vm1344, %v1098, 2147483647
        %v1361 = vsel %vm1345, %v1099, 2147483647
        %v1362 = vsel %vm1346, %v1100, 2147483647
        %v1363 = vsel %vm1347, %v1101, 2147483647
        %v1364 = vsel %vm1348, %v1102, 2147483647
        %v1365 = vsel %vm1349, %v1103, 2147483647
        %v1366 = vsel %vm1350, %v1104, 2147483647
        %v1367 = vsel %vm1351, %v1105, 2147483647
        %v1368 = vsel %vm1352, %v1106, 2147483647
        %v1369 = vsel %vm1353, %v1107, 2147483647
        %v1370 = vsel %vm1354, %v1108, 2147483647
        %v1371 = vsel %vm1355, %v1109, 2147483647
        %v1372 = vsel %vm869, %v1356, 2147483647
        %v1373 = vsel %vm869, %v1357, 2147483647
        %v1374 = vsel %vm869, %v1358, 2147483647
        %v1375 = vsel %vm869, %v1359, 2147483647
        %v1376 = vsel %vm869, %v1360, 2147483647
        %vm1377 = vcmp.lt.s32.totalorder %v1372, %v1376
        %v1378 = vsel %vm1377, %v1372, %v1376
        %v1379 = vsel %vm869, %v1361, 2147483647
        %vm1380 = vcmp.lt.s32.totalorder %v1373, %v1379
        %v1381 = vsel %vm1380, %v1373, %v1379
        %v1382 = vsel %vm869, %v1362, 2147483647
        %vm1383 = vcmp.lt.s32.totalorder %v1374, %v1382
        %v1384 = vsel %vm1383, %v1374, %v1382
        %v1385 = vsel %vm869, %v1363, 2147483647
        %vm1386 = vcmp.lt.s32.totalorder %v1375, %v1385
        %v1387 = vsel %vm1386, %v1375, %v1385
        %v1388 = vsel %vm869, %v1364, 2147483647
        %vm1389 = vcmp.lt.s32.totalorder %v1378, %v1388
        %v1390 = vsel %vm1389, %v1378, %v1388
        %v1391 = vsel %vm869, %v1365, 2147483647
        %vm1392 = vcmp.lt.s32.totalorder %v1381, %v1391
        %v1393 = vsel %vm1392, %v1381, %v1391
        %v1394 = vsel %vm869, %v1366, 2147483647
        %vm1395 = vcmp.lt.s32.totalorder %v1384, %v1394
        %v1396 = vsel %vm1395, %v1384, %v1394
        %v1397 = vsel %vm869, %v1367, 2147483647
        %vm1398 = vcmp.lt.s32.totalorder %v1387, %v1397
        %v1399 = vsel %vm1398, %v1387, %v1397
        %v1400 = vsel %vm869, %v1368, 2147483647
        %vm1401 = vcmp.lt.s32.totalorder %v1390, %v1400
        %v1402 = vsel %vm1401, %v1390, %v1400
        %v1403 = vsel %vm869, %v1369, 2147483647
        %vm1404 = vcmp.lt.s32.totalorder %v1393, %v1403
        %v1405 = vsel %vm1404, %v1393, %v1403
        %v1406 = vsel %vm869, %v1370, 2147483647
        %vm1407 = vcmp.lt.s32.totalorder %v1396, %v1406
        %v1408 = vsel %vm1407, %v1396, %v1406
        %v1409 = vsel %vm869, %v1371, 2147483647
        %vm1410 = vcmp.lt.s32.totalorder %v1399, %v1409
        %v1411 = vsel %vm1410, %v1399, %v1409
        %vm1412 = vcmp.lt.s32.totalorder %v1402, %v1405
        %v1413 = vsel %vm1412, %v1402, %v1405
        %vm1414 = vcmp.lt.s32.totalorder %v1408, %v1411
        %v1415 = vsel %vm1414, %v1408, %v1411
        %vm1416 = vcmp.lt.s32.totalorder %v1413, %v1415
        %v1417 = vsel %vm1416, %v1413, %v1415
        %v1418 = vrot.slane %v1417, 4
        %vm1419 = vcmp.lt.s32.totalorder %v1417, %v1418
        %v1420 = vsel %vm1419, %v1417, %v1418
        %v1421 = vrot.slane %v1420, 2
        %vm1422 = vcmp.lt.s32.totalorder %v1420, %v1421
        %v1423 = vsel %vm1422, %v1420, %v1421
        %v1424 = vrot.slane %v1423, 1
        %vm1425 = vcmp.lt.s32.totalorder %v1423, %v1424
        %v1426 = vsel %vm1425, %v1423, %v1424
        %vm1427 = vcmp.eq.s32.totalorder %v1094, %v1426
        %vm1428 = vcmp.eq.s32.totalorder %v1095, %v1426
        %vm1429 = vcmp.eq.s32.totalorder %v1096, %v1426
        %vm1430 = vcmp.eq.s32.totalorder %v1097, %v1426
        %vm1431 = vcmp.eq.s32.totalorder %v1098, %v1426
        %vm1432 = vcmp.eq.s32.totalorder %v1099, %v1426
        %vm1433 = vcmp.eq.s32.totalorder %v1100, %v1426
        %vm1434 = vcmp.eq.s32.totalorder %v1101, %v1426
        %vm1435 = vcmp.eq.s32.totalorder %v1102, %v1426
        %vm1436 = vcmp.eq.s32.totalorder %v1103, %v1426
        %vm1437 = vcmp.eq.s32.totalorder %v1104, %v1426
        %vm1438 = vcmp.eq.s32.totalorder %v1105, %v1426
        %vm1439 = vcmp.eq.s32.totalorder %v1106, %v1426
        %vm1440 = vcmp.eq.s32.totalorder %v1107, %v1426
        %vm1441 = vcmp.eq.s32.totalorder %v1108, %v1426
        %vm1442 = vcmp.eq.s32.totalorder %v1109, %v1426
        %v1443 = vsel %vm1427, %v852, 0.0
        %v1444 = vsel %vm1428, %v853, 0.0
        %v1445 = vsel %vm1429, %v854, 0.0
        %v1446 = vsel %vm1430, %v855, 0.0
        %v1447 = vsel %vm1431, %v856, 0.0
        %v1448 = vsel %vm1432, %v857, 0.0
        %v1449 = vsel %vm1433, %v858, 0.0
        %v1450 = vsel %vm1434, %v859, 0.0
        %v1451 = vsel %vm1435, %v860, 0.0
        %v1452 = vsel %vm1436, %v861, 0.0
        %v1453 = vsel %vm1437, %v862, 0.0
        %v1454 = vsel %vm1438, %v863, 0.0
        %v1455 = vsel %vm1439, %v864, 0.0
        %v1456 = vsel %vm1440, %v865, 0.0
        %v1457 = vsel %vm1441, %v866, 0.0
        %v1458 = vsel %vm1442, %v867, 0.0
        %v1459 = vsel %vm869, %v1443, 0.0
        %v1460 = vsel %vm869, %v1444, 0.0
        %v1461 = vadd.f32 %v1459, %v1460
        %v1462 = vsel %vm869, %v1445, 0.0
        %v1463 = vadd.f32 %v1461, %v1462
        %v1464 = vsel %vm869, %v1446, 0.0
        %v1465 = vadd.f32 %v1463, %v1464
        %v1466 = vsel %vm869, %v1447, 0.0
        %v1467 = vadd.f32 %v1465, %v1466
        %v1468 = vsel %vm869, %v1448, 0.0
        %v1469 = vadd.f32 %v1467, %v1468
        %v1470 = vsel %vm869, %v1449, 0.0
        %v1471 = vadd.f32 %v1469, %v1470
        %v1472 = vsel %vm869, %v1450, 0.0
        %v1473 = vadd.f32 %v1471, %v1472
        %v1474 = vsel %vm869, %v1451, 0.0
        %v1475 = vadd.f32 %v1473, %v1474
        %v1476 = vsel %vm869, %v1452, 0.0
        %v1477 = vadd.f32 %v1475, %v1476
        %v1478 = vsel %vm869, %v1453, 0.0
        %v1479 = vadd.f32 %v1477, %v1478
        %v1480 = vsel %vm869, %v1454, 0.0
        %v1481 = vadd.f32 %v1479, %v1480
        %v1482 = vsel %vm869, %v1455, 0.0
        %v1483 = vadd.f32 %v1481, %v1482
        %v1484 = vsel %vm869, %v1456, 0.0
        %v1485 = vadd.f32 %v1483, %v1484
        %v1486 = vsel %vm869, %v1457, 0.0
        %v1487 = vadd.f32 %v1485, %v1486
        %v1488 = vsel %vm869, %v1458, 0.0
        %v1489 = vadd.f32 %v1487, %v1488
        %v1490 = vrot.slane %v1489, 4
        %v1491 = vadd.f32 %v1489, %v1490
        %v1492 = vrot.slane %v1491, 2
        %v1493 = vadd.f32 %v1491, %v1492
        %v1494 = vrot.slane %v1493, 1
        %v1495 = vadd.f32 %v1493, %v1494
        %v1496 = vld [vmem:[#allocation2] sm:$0x1]
        %v1497 = vld [vmem:[#allocation3] sm:$0x1]
        %v1498 = vld [vmem:[#allocation4] sm:$0x1]
        %v1499 = vld [vmem:[#allocation5] sm:$0x1]
        %vm1500 = vcmp.lt.f32.partialorder %v1130, %v1496
        %v1501 = vsel %vm1500, %v1130, %v1496
        %v1502 = vsel %vm1500, %v1286, %v1497
        %v1503 = vsel %vm1500, %v1496, %v1130
        %v1504 = vsel %vm1500, %v1497, %v1286
        %vm1505 = vcmp.lt.f32.partialorder %v1503, %v1498
        %v1506 = vsel %vm1505, %v1503, %v1498
        %v1507 = vsel %vm1505, %v1504, %v1499
        %vm1508 = vcmp.lt.f32.partialorder %v1339, %v1506
        %v1509 = vsel %vm1508, %v1339, %v1506
        %v1510 = vsel %vm1508, %v1495, %v1507
        %vm1511 = vcmask 253952
        %1512 = vst.msk [vmem:[#allocation2] sm:$0x1] %vm1511, %v1501
        %1513 = vst.msk [vmem:[#allocation3] sm:$0x1] %vm1511, %v1502
        %1514 = vst.msk [vmem:[#allocation4] sm:$0x1] %vm1511, %v1509
        %1515 = vst.msk [vmem:[#allocation5] sm:$0x1] %vm1511, %v1510
        %p1516 = scmp.eq.s32.totalorder %s28, 1
        // Predicated region
        $region49: #{tpu_custom_call.1} parent=31 // pred_check
          %p1517 = pneg %p1516
        $region50: #{tpu_custom_call.1} parent=31 // pred_check_branch
          %1519 = sbr.rel (%p1517) target = $region52
        $region51: #{tpu_custom_call.1} parent=31 // pred_region
          %v1520 = vld [vmem:[#allocation6] sm:$0x1]
          %v1521 = vld [vmem:[#allocation2] sm:$0x1]
          %v1522 = vrsqrt.pop %v1521
          %v1523 = vmul.f32 %v1521, %v1522
          %vm1524 = vcmp.eq.f32.partialorder %v1521, inf
          %v1525 = vsel %vm1524, %v1521, %v1523
          %vm1526 = vcmp.eq.f32.partialorder %v1521, 0.0
          %v1527 = vand.u32 %v1521, 2147483648
          %v1528 = vsel %vm1526, %v1527, %v1525
          %v1529 = vsel %vm1511, %v1528, 0.0
          %1530 = vadd.xlane.f32.xlu0 %v1529
          %v1531 = vpop.xlane.xlu0 %1530
          %v1532 = vrot.slane %v1531, 4
          %v1533 = vadd.f32 %v1531, %v1532
          %v1534 = vrot.slane %v1533, 2
          %v1535 = vadd.f32 %v1533, %v1534
          %v1536 = vrot.slane %v1535, 1
          %v1537 = vadd.f32 %v1535, %v1536
          %s1538 = vtos %v1537
          %v1539 = vld [vmem:[#allocation3] sm:$0x1]
          %v1540 = vld [vmem:[#allocation5] sm:$0x1]
          %v1541 = vadd.f32 %v1539, %v1540
          %v1542 = vsel %vm1511, %v1541, 0.0
          %1543 = vadd.xlane.f32.xlu0 %v1542
          %v1544 = vpop.xlane.xlu0 %1543
          %v1545 = vrot.slane %v1544, 4
          %v1546 = vadd.f32 %v1544, %v1545
          %v1547 = vrot.slane %v1546, 2
          %v1548 = vadd.f32 %v1546, %v1547
          %v1549 = vrot.slane %v1548, 1
          %v1550 = vadd.f32 %v1548, %v1549
          %s1551 = vtos %v1550
          %s1552 = smul.f32 %s1551, 0.5
          %v1553 = vlaneseq
          %v1554 = vand.u32 %v1553, 127
          %vm1555 = vcmp.eq.s32.totalorder %v1554, 0
          %1557 = vset.pattern.permute.xlu0 0
          %1558 = vperm.xlu0 %1557, %v1520
          %v1559 = vpop.permute.xlu0 %1558
          %v1561 = vlaneseq
          %v1562 = vshrl.u32 %v1561, 7
          %v1563 = vsub.s32 0, %v1562
          %v1564 = vrot.slane %v1559, %v1563
          %v1565 = vsel %vm1555, %v1564, 0.0
          %vm1566 = vcmp.eq.s32.totalorder %v1554, 1
          %v1567 = vstv %s1538
          %v1568 = vsel %vm1566, %v1567, 0.0
          %v1569 = vadd.f32 %v1565, %v1568
          %vm1570 = vcmp.eq.s32.totalorder %v1554, 2
          %v1571 = vstv %s1552
          %v1572 = vsel %vm1570, %v1571, 0.0
          %v1573 = vadd.f32 %v1569, %v1572
          %1574 = vst [vmem:[%s274] sm:$0x1] %v1573
        $region52: #{tpu_custom_call.1} parent=31 // pred_fallthru
          _
        %s1575 = sand.u32 %s123, 1
        %s1576 = scalar_lea.sflag [#allocation9], %s1575
        %s1577 = sand.u32 %s123, 1
        %s1578 = scalar_lea.vmem [#allocation13], %s1577
        // Predicated region
        $region53: #{tpu_custom_call.1} parent=31 // pred_check
          %p1579 = pneg %p133
        $region54: #{tpu_custom_call.1} parent=31 // pred_check_branch
          %1581 = sbr.rel (%p1579) target = $region56
        $region55: #{tpu_custom_call.1} parent=31 // pred_region
          %s1583 = ssub.s32 16, 16
          %1584 = vsyncadd %s1576, %s1583
          %s1585 = smul.addr %s27, 16
          %s1586 = scalar_lea.hbm %s3, %s1585
          %s1588 = sshll.u32 %s1578, 4
          %s1589 = int_to_ptr.vmem [resolvable:$true] %s1588
          %1591 = dma.vmem_to_hbm [thread:$0]  %s1589, 16, %s1586, %s1576
        $region56: #{tpu_custom_call.1} parent=31 // pred_fallthru
          _
      $region32: #{tpu_custom_call.1} parent=5 // pred_fallthru
        _
      %p1592 = scmp.le.s32.totalorder 2, %s18
      // Predicated region
      $region57: #{tpu_custom_call.1} parent=5 // pred_check
        %p1593 = pneg %p1592
      $region58: #{tpu_custom_call.1} parent=5 // pred_check_branch
        %1595 = sbr.rel (%p1593) target = $region60
      $region59: #{tpu_custom_call.1} parent=5 // pred_region
        %s1596 = ssub.s32 %s18, 2
        // Predicated region
        $region61: #{tpu_custom_call.1} parent=59 // pred_check
          %p1597 = pneg %p139
        $region62: #{tpu_custom_call.1} parent=59 // pred_check_branch
          %1599 = sbr.rel (%p1597) target = $region64
        $region63: #{tpu_custom_call.1} parent=59 // pred_region
          %s1600 = sand.u32 %s124, 1
          %s1601 = scalar_lea.sflag [#allocation9], %s1600
          %s1602 = sand.u32 %s124, 1
          %s1603 = scalar_lea.vmem [#allocation13], %s1602
          %1604 = dma.done %s1601, 16
        $region64: #{tpu_custom_call.1} parent=59 // pred_fallthru
          _
      $region60: #{tpu_custom_call.1} parent=5 // pred_fallthru
        _
    $region6: #{tpu_custom_call.1} parent=1 // loop_footer
      %s22 = sadd.s32 1, %s18
    $region7: #{tpu_custom_call.1} parent=1 // loop_footer_branch
      %17 = sbr.rel target = $region3
    $region8: #{tpu_custom_call.1} parent=1 // loop_exit
      _
    %1605 = vsyncpa [#allocation8], 1
    %s1606 = scalar_lea.sflag [#allocation8], 1
    %1607 = vsyncpa %s1606, 1
    %1608 = vsyncpa [#allocation11], 1
    %s1609 = scalar_lea.sflag [#allocation11], 1
    %1610 = vsyncpa %s1609, 1
    %1611 = vsyncpa [#allocation9], 1
    %s1612 = scalar_lea.sflag [#allocation9], 1
    %1613 = vsyncpa %s1612, 1

</llo_original>
